<compile_context>
chip_gen: v7x
topology: tpu7x:2x2x1
jax: 0.10.0
libtpu: 0.0.40
codegen_flags: <defaults>
</compile_context>

<pallas_src>
import functools

import jax
import jax.numpy as jnp
from jax import lax
from jax.experimental import pallas as pl
from jax.experimental.pallas import tpu as pltpu

EPS = 1e-07


def _round_up(x, m):
    return ((x + m - 1) // m) * m


def _cdiv(a, b):
    return (a + b - 1) // b


def _supcon_kernel(a_ref, ct_ref, rlab_ref, clab_ref, loss_ref,
                   m_sc, l_sc, sadc_sc, smask_sc, *,
                   temperature, base_temperature, tm, tn,
                   npad_cols, ct_resident, normalized):
    i = pl.program_id(0)              # anchor (row) block      -- "parallel"
    j = pl.program_id(1)              # contrast (column) block -- reduction axis
    nj = pl.num_programs(1)

    @pl.when(j == 0)
    def _init():
        if not normalized:
            m_sc[...] = jnp.full(m_sc.shape, -jnp.inf, dtype=m_sc.dtype)
        l_sc[...] = jnp.zeros(l_sc.shape, dtype=l_sc.dtype)
        sadc_sc[...] = jnp.zeros(sadc_sc.shape, dtype=sadc_sc.dtype)
        smask_sc[...] = jnp.zeros(smask_sc.shape, dtype=smask_sc.dtype)

    # Contrast tile (d_pad, tn), already lane-dense / pre-transposed in the wrapper.
    if ct_resident:
        ct = ct_ref[j]                # whole operand resident in VMEM (loaded once)
    else:
        ct = ct_ref[0]                # streamed one tile per column step

    # bf16 MXU matmul with f32 accumulation; 1/T applied once on the f32 result
    # (the anchor tile is resident across j, so no per-step bf16 prescale).
    inv_t = jnp.float32(1.0 / temperature)
    adc = jnp.dot(a_ref[...], ct, preferred_element_type=jnp.float32) * inv_t

    rlab = rlab_ref[...]              # (tm, 1) int32, -1 == pad
    clab = clab_ref[...]              # (1, tn) int32, -1 == pad
    # Positives.  NOTE: pad columns (clab == -1) are intentionally NOT masked here:
    # real anchor rows have rlab >= 0 so they can never match, and padded anchor rows
    # are discarded by the wrapper slice per_row[:n_anchor].
    pos = rlab == clab                # (tm, tn) bool

    if normalized:
        # L2-normalized features  =>  adc <= 1/T: constant shift, no online max.
        m_new = jnp.float32(1.0 / temperature)
        p = jnp.exp(adc - m_new)
        l_sc[...] = l_sc[...] + jnp.sum(p, axis=1, keepdims=True)
    else:
        m_prev = m_sc[...]
        m_new = jnp.maximum(m_prev, jnp.max(adc, axis=1, keepdims=True))
        alpha = jnp.exp(m_prev - m_new)
        p = jnp.exp(adc - m_new)
        l_sc[...] = alpha * l_sc[...] + jnp.sum(p, axis=1, keepdims=True)
        m_sc[...] = m_new

    sadc_sc[...] = sadc_sc[...] + jnp.sum(jnp.where(pos, adc, 0.0),
                                          axis=1, keepdims=True)
    smask_sc[...] = smask_sc[...] + jnp.sum(pos.astype(jnp.float32),
                                            axis=1, keepdims=True)

    # Self-contrast (diagonal) exclusion.  With asymmetric tiles the diagonal can
    # straddle several column tiles of one row block; only intersecting tiles pay.
    row_lo = i * tm
    col_lo = j * tn
    has_diag = (row_lo < col_lo + tn) & (col_lo < row_lo + tm)

    @pl.when(has_diag)
    def _remove_self():
        offset = col_lo - row_lo                          # global diag: rr == cc + offset
        rr = lax.broadcasted_iota(jnp.int32, (tm, tn), 0)
        cc = lax.broadcasted_iota(jnp.int32, (tm, tn), 1)
        diag_adc = jnp.sum(jnp.where(rr == cc + offset, adc, 0.0),
                           axis=1, keepdims=True)         # (tm, 1)
        r1 = lax.broadcasted_iota(jnp.int32, (tm, 1), 0)
        row_has_diag = (r1 >= offset) & (r1 < offset + tn)  # (tm, 1) bool
        # The self element is always a positive (same sample) for real anchor rows.
        l_sc[...] = l_sc[...] - jnp.where(row_has_diag,
                                          jnp.exp(diag_adc - m_new), 0.0)
        sadc_sc[...] = sadc_sc[...] - jnp.where(row_has_diag, diag_adc, 0.0)
        smask_sc[...] = smask_sc[...] - row_has_diag.astype(jnp.float32)

    # Finalize this row block on the last column step.
    @pl.when(j == nj - 1)
    def _finalize():
        m_fin = m_new if normalized else m_sc[...]
        l_fin = l_sc[...]
        if npad_cols > 0:
            # Zero-padded contrast columns have adc == 0 exactly, so each contributed
            # exactly exp(0 - m_fin) to l; remove them here instead of masking every
            # tile.  The clamp guards pathological cancellation only.
            l_fin = jnp.maximum(l_fin - npad_cols * jnp.exp(-m_fin), 1e-30)
        lse = m_fin + jnp.log(l_fin)            # log sum_{k valid, k != self} exp(adc_k)
        s_mask = smask_sc[...]
        mean_log_prob_pos = (sadc_sc[...] - lse * s_mask) / (s_mask + EPS)
        loss_ref[...] = (-(temperature / base_temperature)) * mean_log_prob_pos


def supcon_loss(features, labels=None, mask=None, scores=None,
                temperature=0.07, contrast_mode='all', base_temperature=0.07,
                features_normalized=False, ct_resident=None):
    """JAX/Pallas equivalent of SupConLoss.forward (single-device path)."""
    # TODO(synk): distributed concat_all_gather (args.multi_gpu) path not implemented;
    # inputs are assumed to be already gathered on this device.
    del scores  # unused by the reference forward as well
    features = jnp.asarray(features)
    if features.ndim < 3:
        raise ValueError('`features` needs to be [bsz, n_views, ...], '
                         'at least 3 dimensions are required')
    if features.ndim > 3:
        features = features.reshape(features.shape[0], features.shape[1], -1)

    bsz, n_views, dim = features.shape

    if labels is not None and mask is not None:
        raise ValueError('Cannot define both `labels` and `mask`')
    if mask is not None:
        # TODO(synk): explicit [bsz, bsz] mask path not supported by the tiled kernel
        # (the positive mask is built in-kernel from per-sample labels).
        raise NotImplementedError('explicit `mask` is not supported by the Pallas kernel')
    if labels is None:
        labels = jnp.arange(bsz, dtype=jnp.int32)      # SimCLR: eye(bsz) positives
    else:
        labels = jnp.asarray(labels).reshape(-1).astype(jnp.int32)
        if labels.shape[0] != bsz:
            raise ValueError('Num of labels does not match num of features')
        # keep labels >= 0 so -1 can be used as the padding sentinel
        labels = labels - jnp.minimum(jnp.min(labels), 0)

    # contrast_feature = cat(unbind(features, dim=1), dim=0) -> [N, D], view-major.
    n_contrast = bsz * n_views
    cf = jnp.transpose(features, (1, 0, 2)).reshape(n_contrast, dim).astype(jnp.float32)
    c_labels = jnp.tile(labels, n_views)               # label of contrast row k

    if contrast_mode == 'one':
        n_anchor = bsz
        af = cf[:bsz]                                  # view 0 == first bsz rows
        a_labels = c_labels[:bsz]
    elif contrast_mode == 'all':
        n_anchor = n_contrast
        af = cf
        a_labels = c_labels
    else:
        raise ValueError('Unknown mode: {}'.format(contrast_mode))

    # ---- tiling -----------------------------------------------------------------
    # Contrast (lane) tile.
    tn = 256 if n_contrast >= 256 else 128
    # Anchor tile: the anchor block is VMEM-resident across the column axis, so
    # arithmetic intensity ~ tm FLOP/byte on the streamed contrast operand.  Grow tm,
    # but keep >= 2 row blocks so the "parallel" axis can feed both v7x TensorCores.
    if n_anchor <= 128:
        tm = 128
    else:
        tm = 512
        while tm > 128 and _cdiv(n_anchor, tm) < 2:
            tm //= 2

    n_a_pad = _round_up(n_anchor, tm)
    n_c_pad = _round_up(n_contrast, tn)
    d_pad = _round_up(max(dim, 128), 128)
    npad_cols = n_c_pad - n_contrast
    n_cb = n_c_pad // tn

    # Keep the whole contrast operand VMEM-resident (loaded once) when it comfortably
    # fits even v7x's 64 MiB VMEM (2x for potential double-buffering); else stream it.
    ct_bytes = d_pad * n_c_pad * 2
    if ct_resident is None:
        ct_resident = 2 * ct_bytes <= 16 * 1024 * 1024
    ct_resident = bool(ct_resident)

    a_feat = jnp.pad(af, ((0, n_a_pad - n_anchor), (0, d_pad - dim))).astype(jnp.bfloat16)
    # Contrast operand, padded, bf16, pre-transposed per block to [n_cb, D, tn] so the
    # MXU contraction is ((1,), (0,)) with the contrast index lane-dense.
    c_pad = jnp.pad(cf, ((0, n_c_pad - n_contrast), (0, d_pad - dim))).astype(jnp.bfloat16)
    c_blocks = jnp.transpose(c_pad.reshape(n_cb, tn, d_pad), (0, 2, 1))   # (n_cb, D, tn)

    rlab = jnp.pad(a_labels, (0, n_a_pad - n_anchor), constant_values=-1).reshape(n_a_pad, 1)
    clab = jnp.pad(c_labels, (0, n_c_pad - n_contrast), constant_values=-1).reshape(1, n_c_pad)

    kernel = functools.partial(
        _supcon_kernel,
        temperature=float(temperature),
        base_temperature=float(base_temperature),
        tm=tm, tn=tn,
        npad_cols=int(npad_cols),
        ct_resident=ct_resident,
        normalized=bool(features_normalized),
    )

    if ct_resident:
        ct_spec = pl.BlockSpec((n_cb, d_pad, tn), lambda i, j: (0, 0, 0))
    else:
        ct_spec = pl.BlockSpec((1, d_pad, tn), lambda i, j: (j, 0, 0))

    # Explicit VMEM budget derived from the working set (instead of a hard-coded
    # 48 MiB that over-allocates on v7x's 64 MiB per-TC VMEM).
    est = (2 * tm * d_pad * 2                                           # anchor tile x2 (bf16)
           + (2 * ct_bytes if ct_resident else 2 * d_pad * tn * 2)      # contrast operand
           + 2 * (tm * 128 * 4 + 8 * tn * 4)                            # label blocks (padded)
           + 2 * tm * 128 * 4                                           # output block (padded)
           + 4 * tm * 128 * 4                                           # accumulator scratch
           + 8 * tm * tn * 4)                                           # f32 tile temporaries
    vmem_limit = int(min(max(32 * 1024 * 1024, est + 16 * 1024 * 1024),
                         64 * 1024 * 1024))

    per_row = pl.pallas_call(
        kernel,
        out_shape=jax.ShapeDtypeStruct((n_a_pad, 1), jnp.float32),
        grid_spec=pltpu.PrefetchScalarGridSpec(
            num_scalar_prefetch=0,
            grid=(n_a_pad // tm, n_c_pad // tn),
            in_specs=[
                pl.BlockSpec((tm, d_pad), lambda i, j: (i, 0)),   # anchor feats (bf16)
                ct_spec,                                          # contrast feats^T blocks
                pl.BlockSpec((tm, 1), lambda i, j: (i, 0)),       # anchor labels (int32)
                pl.BlockSpec((1, tn), lambda i, j: (0, j)),       # contrast labels (int32)
            ],
            out_specs=pl.BlockSpec((tm, 1), lambda i, j: (i, 0)),
            scratch_shapes=[pltpu.VMEM((tm, 1), jnp.float32)] * 4,
        ),
        compiler_params=pltpu.CompilerParams(
            # row blocks are independent -> shard across TensorCores on v7x;
            # the contrast/column axis carries the running accumulators.
            dimension_semantics=("parallel", "arbitrary"),
            vmem_limit_bytes=vmem_limit,
        ),
    )(a_feat, c_blocks, rlab, clab)

    # loss.view(anchor_count, batch_size).mean() == mean over all real anchors.
    return jnp.mean(per_row[:n_anchor, 0])


def _supcon_loss_ref(features, labels=None, temperature=0.07, contrast_mode='all',
                     base_temperature=0.07):
    """Pure-JAX f32 reference mirroring the PyTorch code."""
    bsz, n_views, dim = features.shape
    if labels is None:
        base_mask = jnp.eye(bsz, dtype=jnp.float32)
    else:
        lab = jnp.asarray(labels).reshape(-1, 1)
        base_mask = (lab == lab.T).astype(jnp.float32)
    cf = jnp.transpose(features, (1, 0, 2)).reshape(n_views * bsz, dim)
    if contrast_mode == 'one':
        af = features[:, 0]
        anchor_count = 1
    else:
        af = cf
        anchor_count = n_views
    adc = (af @ cf.T) / temperature
    logits = adc - jnp.max(adc, axis=1, keepdims=True)
    mask = jnp.tile(base_mask, (anchor_count, n_views))
    n_a = anchor_count * bsz
    logits_mask = jnp.ones_like(mask).at[jnp.arange(n_a), jnp.arange(n_a)].set(0.0)
    mask = mask * logits_mask
    exp_logits = jnp.exp(logits) * logits_mask
    log_prob = logits - jnp.log(exp_logits.sum(1, keepdims=True))
    mlpp = (mask * log_prob).sum(1) / (mask.sum(1) + EPS)
    loss = -(temperature / base_temperature) * mlpp
    return loss.reshape(anchor_count, bsz).mean()


if __name__ == "__main__":
    key = jax.random.PRNGKey(0)
    k1, k2, k3, k4 = jax.random.split(key, 4)

    def _norm(x):
        return x / jnp.linalg.norm(x, axis=-1, keepdims=True)

    # --- small config: single 128x128 tile after padding -------------------------
    bsz, n_views, dim = 8, 2, 32
    feats = _norm(jax.random.normal(k1, (bsz, n_views, dim), dtype=jnp.float32))
    labels = jax.random.randint(k2, (bsz,), 0, 4)

    loss1 = jax.block_until_ready(supcon_loss(feats, labels=labels))
    ref1 = _supcon_loss_ref(feats, labels=labels)
    assert jnp.isfinite(loss1), loss1
    assert jnp.allclose(loss1, ref1, rtol=5e-2, atol=5e-2), (loss1, ref1)

    # SimCLR (labels=None) + L2-normalized fast path (constant shift, no online max).
    loss2 = jax.block_until_ready(supcon_loss(feats, labels=None, features_normalized=True))
    ref2 = _supcon_loss_ref(feats, labels=None)
    assert jnp.isfinite(loss2), loss2
    assert jnp.allclose(loss2, ref2, rtol=5e-2, atol=5e-2), (loss2, ref2)

    # --- moderate config: asymmetric tiles (tm=512, tn=256), multi-tile online
    #     accumulation, diagonal straddling column tiles, padded rows/columns ------
    bszL, n_viewsL, dimL = 300, 2, 48
    featsL = _norm(jax.random.normal(k3, (bszL, n_viewsL, dimL), dtype=jnp.float32))
    labelsL = jax.random.randint(k4, (bszL,), 0, 10)

    loss3 = jax.block_until_ready(supcon_loss(featsL, labels=labelsL))
    ref3 = _supcon_loss_ref(featsL, labels=labelsL)
    assert jnp.isfinite(loss3), loss3
    assert jnp.allclose(loss3, ref3, rtol=5e-2, atol=5e-2), (loss3, ref3)

    # Same problem with the streamed (non-VMEM-resident) contrast path.
    loss4 = jax.block_until_ready(supcon_loss(featsL, labels=labelsL, ct_resident=False))
    assert jnp.isfinite(loss4), loss4
    assert jnp.allclose(loss4, ref3, rtol=5e-2, atol=5e-2), (loss4, ref3)

    # contrast_mode='one' (anchor = view 0 only).
    loss5 = jax.block_until_ready(supcon_loss(featsL, labels=labelsL, contrast_mode='one'))
    ref5 = _supcon_loss_ref(featsL, labels=labelsL, contrast_mode='one')
    assert jnp.isfinite(loss5), loss5
    assert jnp.allclose(loss5, ref5, rtol=5e-2, atol=5e-2), (loss5, ref5)

    print("KERNEL_OK")
</pallas_src>

<mosaic_0001>
module attributes {stable_mosaic.version = 11 : i64} {
  func.func @_supcon_kernel(%arg0: i32, %arg1: i32, %arg2: memref<128x128xbf16, #tpu.memory_space<vmem>>, %arg3: memref<1x128x128xbf16, #tpu.memory_space<vmem>>, %arg4: memref<128x1xi32, #tpu.memory_space<vmem>>, %arg5: memref<1x128xi32, #tpu.memory_space<vmem>>, %arg6: memref<128x1xf32, #tpu.memory_space<vmem>>, %arg7: memref<128x1xf32, #tpu.memory_space<vmem>>, %arg8: memref<128x1xf32, #tpu.memory_space<vmem>>, %arg9: memref<128x1xf32, #tpu.memory_space<vmem>>, %arg10: memref<128x1xf32, #tpu.memory_space<vmem>>) attributes {dimension_semantics = [#tpu.dimension_semantics<parallel>, #tpu.dimension_semantics<arbitrary>], iteration_bounds = array<i64: 1, 1>, scalar_prefetch = 0 : i64, scratch_operands = 4 : i64, tpu.core_type = #tpu.core_type<tc>, window_params = [{transform_indices = @transform_0, window_bounds = array<i64: 128, 128>}, {pipeline_mode = #tpu.pipeline_mode<synchronous>, transform_indices = @transform_1, window_bounds = array<i64: 1, 128, 128>}, {transform_indices = @transform_2, window_bounds = array<i64: 128, 1>}, {transform_indices = @transform_3, window_bounds = array<i64: 1, 128>}, {transform_indices = @transform_4, window_bounds = array<i64: 128, 1>}]} {
    %c0_i32 = arith.constant 0 : i32
    %0 = arith.cmpi eq, %arg1, %c0_i32 : i32
    %1 = arith.extui %0 : i1 to i32
    %c0_i32_0 = arith.constant 0 : i32
    %2 = arith.cmpi ne, %1, %c0_i32_0 : i32
    scf.if %2 {
      %cst_36 = arith.constant 0xFF800000 : f32
      %57 = vector.broadcast %cst_36 : f32 to vector<128x1xf32>
      %c0_37 = arith.constant 0 : index
      %c0_38 = arith.constant 0 : index
      %58 = vector.load %arg7[%c0_37, %c0_38] : memref<128x1xf32, #tpu.memory_space<vmem>>, vector<128x1xf32>
      tpu.vector_store %arg7[%c0_37, %c0_38], %57 {strides = array<i32>} : memref<128x1xf32, #tpu.memory_space<vmem>>, vector<128x1xf32>,
      %cst_39 = arith.constant 0.000000e+00 : f32
      %59 = vector.broadcast %cst_39 : f32 to vector<128x1xf32>
      %c0_40 = arith.constant 0 : index
      %c0_41 = arith.constant 0 : index
      %60 = vector.load %arg8[%c0_40, %c0_41] : memref<128x1xf32, #tpu.memory_space<vmem>>, vector<128x1xf32>
      tpu.vector_store %arg8[%c0_40, %c0_41], %59 {strides = array<i32>} : memref<128x1xf32, #tpu.memory_space<vmem>>, vector<128x1xf32>,
      %cst_42 = arith.constant 0.000000e+00 : f32
      %61 = vector.broadcast %cst_42 : f32 to vector<128x1xf32>
      %c0_43 = arith.constant 0 : index
      %c0_44 = arith.constant 0 : index
      %62 = vector.load %arg9[%c0_43, %c0_44] : memref<128x1xf32, #tpu.memory_space<vmem>>, vector<128x1xf32>
      tpu.vector_store %arg9[%c0_43, %c0_44], %61 {strides = array<i32>} : memref<128x1xf32, #tpu.memory_space<vmem>>, vector<128x1xf32>,
      %cst_45 = arith.constant 0.000000e+00 : f32
      %63 = vector.broadcast %cst_45 : f32 to vector<128x1xf32>
      %c0_46 = arith.constant 0 : index
      %c0_47 = arith.constant 0 : index
      %64 = vector.load %arg10[%c0_46, %c0_47] : memref<128x1xf32, #tpu.memory_space<vmem>>, vector<128x1xf32>
      tpu.vector_store %arg10[%c0_46, %c0_47], %63 {strides = array<i32>} : memref<128x1xf32, #tpu.memory_space<vmem>>, vector<128x1xf32>,
    } else {
    }
    %3 = arith.index_cast %arg1 : i32 to index
    %c0 = arith.constant 0 : index
    %c0_1 = arith.constant 0 : index
    %4 = vector.load %arg3[%3, %c0, %c0_1] : memref<1x128x128xbf16, #tpu.memory_space<vmem>>, vector<1x128x128xbf16>
    %5 = vector.shape_cast %4 : vector<1x128x128xbf16> to vector<128x128xbf16>
    %c0_2 = arith.constant 0 : index
    %c0_3 = arith.constant 0 : index
    %6 = vector.load %arg2[%c0_2, %c0_3] : memref<128x128xbf16, #tpu.memory_space<vmem>>, vector<128x128xbf16>
    %cst = arith.constant dense<0.000000e+00> : vector<128x128xf32>
    %7 = tpu.matmul %6, %5, %cst {dimension_numbers = #tpu.dot_dimension_numbers<[1], [0], [0], [1], [0, 0, 1, 1], [], []>} : vector<128x128xbf16>, vector<128x128xbf16>, vector<128x128xf32> -> vector<128x128xf32>
    %cst_4 = arith.constant 14.2857141 : f32
    %8 = vector.broadcast %cst_4 : f32 to vector<128x128xf32>
    %9 = arith.mulf %7, %8 : vector<128x128xf32>
    %c0_5 = arith.constant 0 : index
    %c0_6 = arith.constant 0 : index
    %10 = vector.load %arg4[%c0_5, %c0_6] : memref<128x1xi32, #tpu.memory_space<vmem>>, vector<128x1xi32>
    %c0_7 = arith.constant 0 : index
    %c0_8 = arith.constant 0 : index
    %11 = vector.load %arg5[%c0_7, %c0_8] : memref<1x128xi32, #tpu.memory_space<vmem>>, vector<1x128xi32>
    %12 = vector.broadcast %10 : vector<128x1xi32> to vector<128x128xi32>
    %13 = vector.broadcast %11 : vector<1x128xi32> to vector<128x128xi32>
    %14 = arith.cmpi eq, %12, %13 : vector<128x128xi32>
    %c0_9 = arith.constant 0 : index
    %c0_10 = arith.constant 0 : index
    %15 = vector.load %arg7[%c0_9, %c0_10] : memref<128x1xf32, #tpu.memory_space<vmem>>, vector<128x1xf32>
    %cst_11 = arith.constant dense<0xFF800000> : vector<128xf32>
    %16 = vector.multi_reduction <maximumf>, %9, %cst_11 [1] : vector<128x128xf32> to vector<128xf32>
    %17 = vector.shape_cast %16 : vector<128xf32> to vector<128x1xf32>
    %18 = arith.maximumf %15, %17 : vector<128x1xf32>
    %19 = arith.subf %15, %18 : vector<128x1xf32>
    %20 = math.exp %19 : vector<128x1xf32>
    %21 = vector.broadcast %18 : vector<128x1xf32> to vector<128x128xf32>
    %22 = arith.subf %9, %21 : vector<128x128xf32>
    %23 = math.exp %22 : vector<128x128xf32>
    %c0_12 = arith.constant 0 : index
    %c0_13 = arith.constant 0 : index
    %24 = vector.load %arg8[%c0_12, %c0_13] : memref<128x1xf32, #tpu.memory_space<vmem>>, vector<128x1xf32>
    %25 = arith.mulf %20, %24 : vector<128x1xf32>
    %cst_14 = arith.constant dense<0.000000e+00> : vector<128xf32>
    %26 = vector.multi_reduction <add>, %23, %cst_14 [1] : vector<128x128xf32> to vector<128xf32>
    %27 = vector.shape_cast %26 : vector<128xf32> to vector<128x1xf32>
    %28 = arith.addf %25, %27 : vector<128x1xf32>
    %c0_15 = arith.constant 0 : index
    %c0_16 = arith.constant 0 : index
    %29 = vector.load %arg8[%c0_15, %c0_16] : memref<128x1xf32, #tpu.memory_space<vmem>>, vector<128x1xf32>
    tpu.vector_store %arg8[%c0_15, %c0_16], %28 {strides = array<i32>} : memref<128x1xf32, #tpu.memory_space<vmem>>, vector<128x1xf32>,
    %c0_17 = arith.constant 0 : index
    %c0_18 = arith.constant 0 : index
    %30 = vector.load %arg7[%c0_17, %c0_18] : memref<128x1xf32, #tpu.memory_space<vmem>>, vector<128x1xf32>
    tpu.vector_store %arg7[%c0_17, %c0_18], %18 {strides = array<i32>} : memref<128x1xf32, #tpu.memory_space<vmem>>, vector<128x1xf32>,
    %c0_19 = arith.constant 0 : index
    %c0_20 = arith.constant 0 : index
    %31 = vector.load %arg9[%c0_19, %c0_20] : memref<128x1xf32, #tpu.memory_space<vmem>>, vector<128x1xf32>
    %cst_21 = arith.constant 0.000000e+00 : f32
    %32 = vector.broadcast %cst_21 : f32 to vector<128x128xf32>
    %33 = arith.select %14, %9, %32 : vector<128x128xi1>, vector<128x128xf32>
    %cst_22 = arith.constant dense<0.000000e+00> : vector<128xf32>
    %34 = vector.multi_reduction <add>, %33, %cst_22 [1] : vector<128x128xf32> to vector<128xf32>
    %35 = vector.shape_cast %34 : vector<128xf32> to vector<128x1xf32>
    %36 = arith.addf %31, %35 : vector<128x1xf32>
    %c0_23 = arith.constant 0 : index
    %c0_24 = arith.constant 0 : index
    %37 = vector.load %arg9[%c0_23, %c0_24] : memref<128x1xf32, #tpu.memory_space<vmem>>, vector<128x1xf32>
    tpu.vector_store %arg9[%c0_23, %c0_24], %36 {strides = array<i32>} : memref<128x1xf32, #tpu.memory_space<vmem>>, vector<128x1xf32>,
    %c0_25 = arith.constant 0 : index
    %c0_26 = arith.constant 0 : index
    %38 = vector.load %arg10[%c0_25, %c0_26] : memref<128x1xf32, #tpu.memory_space<vmem>>, vector<128x1xf32>
    %39 = arith.extui %14 : vector<128x128xi1> to vector<128x128xi32>
    %40 = arith.sitofp %39 : vector<128x128xi32> to vector<128x128xf32>
    %cst_27 = arith.constant dense<0.000000e+00> : vector<128xf32>
    %41 = vector.multi_reduction <add>, %40, %cst_27 [1] : vector<128x128xf32> to vector<128xf32>
    %42 = vector.shape_cast %41 : vector<128xf32> to vector<128x1xf32>
    %43 = arith.addf %38, %42 : vector<128x1xf32>
    %c0_28 = arith.constant 0 : index
    %c0_29 = arith.constant 0 : index
    %44 = vector.load %arg10[%c0_28, %c0_29] : memref<128x1xf32, #tpu.memory_space<vmem>>, vector<128x1xf32>
    tpu.vector_store %arg10[%c0_28, %c0_29], %43 {strides = array<i32>} : memref<128x1xf32, #tpu.memory_space<vmem>>, vector<128x1xf32>,
    %c128_i32 = arith.constant 128 : i32
    %45 = arith.muli %arg0, %c128_i32 : i32
    %c128_i32_30 = arith.constant 128 : i32
    %46 = arith.muli %arg1, %c128_i32_30 : i32
    %c128_i32_31 = arith.constant 128 : i32
    %47 = arith.addi %46, %c128_i32_31 : i32
    %48 = arith.cmpi slt, %45, %47 : i32
    %c128_i32_32 = arith.constant 128 : i32
    %49 = arith.addi %45, %c128_i32_32 : i32
    %50 = arith.cmpi slt, %46, %49 : i32
    %51 = arith.andi %48, %50 : i1
    %52 = arith.extui %51 : i1 to i32
    %c0_i32_33 = arith.constant 0 : i32
    %53 = arith.cmpi ne, %52, %c0_i32_33 : i32
    scf.if %53 {
      %57 = arith.subi %46, %45 : i32
      %58 = tpu.iota {dimensions = array<i32: 0>} : vector<128x128xi32>
      %59 = tpu.iota {dimensions = array<i32: 1>} : vector<128x128xi32>
      %60 = vector.broadcast %57 : i32 to vector<128x128xi32>
      %61 = arith.addi %59, %60 : vector<128x128xi32>
      %62 = arith.cmpi eq, %58, %61 : vector<128x128xi32>
      %cst_36 = arith.constant 0.000000e+00 : f32
      %63 = vector.broadcast %cst_36 : f32 to vector<128x128xf32>
      %64 = arith.select %62, %9, %63 : vector<128x128xi1>, vector<128x128xf32>
      %cst_37 = arith.constant dense<0.000000e+00> : vector<128xf32>
      %65 = vector.multi_reduction <add>, %64, %cst_37 [1] : vector<128x128xf32> to vector<128xf32>
      %66 = vector.shape_cast %65 : vector<128xf32> to vector<128x1xf32>
      %67 = tpu.iota {dimensions = array<i32: 0>} : vector<128x1xi32>
      %68 = vector.broadcast %57 : i32 to vector<128x1xi32>
      %69 = arith.cmpi sge, %67, %68 : vector<128x1xi32>
      %c128_i32_38 = arith.constant 128 : i32
      %70 = arith.addi %57, %c128_i32_38 : i32
      %71 = vector.broadcast %70 : i32 to vector<128x1xi32>
      %72 = arith.cmpi slt, %67, %71 : vector<128x1xi32>
      %73 = arith.andi %69, %72 : vector<128x1xi1>
      %c0_39 = arith.constant 0 : index
      %c0_40 = arith.constant 0 : index
      %74 = vector.load %arg8[%c0_39, %c0_40] : memref<128x1xf32, #tpu.memory_space<vmem>>, vector<128x1xf32>
      %75 = arith.subf %66, %18 : vector<128x1xf32>
      %76 = math.exp %75 : vector<128x1xf32>
      %cst_41 = arith.constant 0.000000e+00 : f32
      %77 = vector.broadcast %cst_41 : f32 to vector<128x1xf32>
      %78 = arith.select %73, %76, %77 : vector<128x1xi1>, vector<128x1xf32>
      %79 = arith.subf %74, %78 : vector<128x1xf32>
      %c0_42 = arith.constant 0 : index
      %c0_43 = arith.constant 0 : index
      %80 = vector.load %arg8[%c0_42, %c0_43] : memref<128x1xf32, #tpu.memory_space<vmem>>, vector<128x1xf32>
      tpu.vector_store %arg8[%c0_42, %c0_43], %79 {strides = array<i32>} : memref<128x1xf32, #tpu.memory_space<vmem>>, vector<128x1xf32>,
      %c0_44 = arith.constant 0 : index
      %c0_45 = arith.constant 0 : index
      %81 = vector.load %arg9[%c0_44, %c0_45] : memref<128x1xf32, #tpu.memory_space<vmem>>, vector<128x1xf32>
      %cst_46 = arith.constant 0.000000e+00 : f32
      %82 = vector.broadcast %cst_46 : f32 to vector<128x1xf32>
      %83 = arith.select %73, %66, %82 : vector<128x1xi1>, vector<128x1xf32>
      %84 = arith.subf %81, %83 : vector<128x1xf32>
      %c0_47 = arith.constant 0 : index
      %c0_48 = arith.constant 0 : index
      %85 = vector.load %arg9[%c0_47, %c0_48] : memref<128x1xf32, #tpu.memory_space<vmem>>, vector<128x1xf32>
      tpu.vector_store %arg9[%c0_47, %c0_48], %84 {strides = array<i32>} : memref<128x1xf32, #tpu.memory_space<vmem>>, vector<128x1xf32>,
      %c0_49 = arith.constant 0 : index
      %c0_50 = arith.constant 0 : index
      %86 = vector.load %arg10[%c0_49, %c0_50] : memref<128x1xf32, #tpu.memory_space<vmem>>, vector<128x1xf32>
      %87 = arith.extui %73 : vector<128x1xi1> to vector<128x1xi32>
      %88 = arith.sitofp %87 : vector<128x1xi32> to vector<128x1xf32>
      %89 = arith.subf %86, %88 : vector<128x1xf32>
      %c0_51 = arith.constant 0 : index
      %c0_52 = arith.constant 0 : index
      %90 = vector.load %arg10[%c0_51, %c0_52] : memref<128x1xf32, #tpu.memory_space<vmem>>, vector<128x1xf32>
      tpu.vector_store %arg10[%c0_51, %c0_52], %89 {strides = array<i32>} : memref<128x1xf32, #tpu.memory_space<vmem>>, vector<128x1xf32>,
    } else {
    }
    %c0_i32_34 = arith.constant 0 : i32
    %54 = arith.cmpi eq, %arg1, %c0_i32_34 : i32
    %55 = arith.extui %54 : i1 to i32
    %c0_i32_35 = arith.constant 0 : i32
    %56 = arith.cmpi ne, %55, %c0_i32_35 : i32
    scf.if %56 {
      %c0_36 = arith.constant 0 : index
      %c0_37 = arith.constant 0 : index
      %57 = vector.load %arg7[%c0_36, %c0_37] : memref<128x1xf32, #tpu.memory_space<vmem>>, vector<128x1xf32>
      %c0_38 = arith.constant 0 : index
      %c0_39 = arith.constant 0 : index
      %58 = vector.load %arg8[%c0_38, %c0_39] : memref<128x1xf32, #tpu.memory_space<vmem>>, vector<128x1xf32>
      %cst_40 = arith.constant 0.000000e+00 : f32
      %59 = vector.broadcast %cst_40 : f32 to vector<128x1xf32>
      %60 = arith.subf %59, %57 : vector<128x1xf32>
      %61 = math.exp %60 : vector<128x1xf32>
      %cst_41 = arith.constant 1.120000e+02 : f32
      %62 = vector.broadcast %cst_41 : f32 to vector<128x1xf32>
      %63 = arith.mulf %62, %61 : vector<128x1xf32>
      %64 = arith.subf %58, %63 : vector<128x1xf32>
      %cst_42 = arith.constant 1.000000e-30 : f32
      %65 = vector.broadcast %cst_42 : f32 to vector<128x1xf32>
      %66 = arith.maximumf %64, %65 : vector<128x1xf32>
      %67 = math.log %66 : vector<128x1xf32>
      %68 = arith.addf %57, %67 : vector<128x1xf32>
      %c0_43 = arith.constant 0 : index
      %c0_44 = arith.constant 0 : index
      %69 = vector.load %arg10[%c0_43, %c0_44] : memref<128x1xf32, #tpu.memory_space<vmem>>, vector<128x1xf32>
      %c0_45 = arith.constant 0 : index
      %c0_46 = arith.constant 0 : index
      %70 = vector.load %arg9[%c0_45, %c0_46] : memref<128x1xf32, #tpu.memory_space<vmem>>, vector<128x1xf32>
      %71 = arith.mulf %68, %69 : vector<128x1xf32>
      %72 = arith.subf %70, %71 : vector<128x1xf32>
      %cst_47 = arith.constant 1.000000e-07 : f32
      %73 = vector.broadcast %cst_47 : f32 to vector<128x1xf32>
      %74 = arith.addf %69, %73 : vector<128x1xf32>
      %75 = arith.divf %72, %74 : vector<128x1xf32>
      %cst_48 = arith.constant -1.000000e+00 : f32
      %76 = vector.broadcast %cst_48 : f32 to vector<128x1xf32>
      %77 = arith.mulf %76, %75 : vector<128x1xf32>
      %c0_49 = arith.constant 0 : index
      %c0_50 = arith.constant 0 : index
      %78 = vector.load %arg6[%c0_49, %c0_50] : memref<128x1xf32, #tpu.memory_space<vmem>>, vector<128x1xf32>
      tpu.vector_store %arg6[%c0_49, %c0_50], %77 {strides = array<i32>} : memref<128x1xf32, #tpu.memory_space<vmem>>, vector<128x1xf32>,
    } else {
    }
    return
  }
  func.func @transform_0(%arg0: i32, %arg1: i32) -> (i32, i32) {
    %c0_i32 = arith.constant 0 : i32
    %c0_i32_0 = arith.constant 0 : i32
    return %arg0, %c0_i32 : i32, i32
  }
  func.func @transform_1(%arg0: i32, %arg1: i32) -> (i32, i32, i32) {
    %c0_i32 = arith.constant 0 : i32
    %c0_i32_0 = arith.constant 0 : i32
    %c0_i32_1 = arith.constant 0 : i32
    %c0_i32_2 = arith.constant 0 : i32
    return %c0_i32, %c0_i32_0, %c0_i32_1 : i32, i32, i32
  }
  func.func @transform_2(%arg0: i32, %arg1: i32) -> (i32, i32) {
    %c0_i32 = arith.constant 0 : i32
    %c0_i32_0 = arith.constant 0 : i32
    return %arg0, %c0_i32 : i32, i32
  }
  func.func @transform_3(%arg0: i32, %arg1: i32) -> (i32, i32) {
    %c0_i32 = arith.constant 0 : i32
    %c0_i32_0 = arith.constant 0 : i32
    return %c0_i32, %arg1 : i32, i32
  }
  func.func @transform_4(%arg0: i32, %arg1: i32) -> (i32, i32) {
    %c0_i32 = arith.constant 0 : i32
    %c0_i32_0 = arith.constant 0 : i32
    return %arg0, %c0_i32 : i32, i32
  }
}

</mosaic_0001>

<llo_original>
// kernel: tpu_custom_call.1
$region0: #{tpu_custom_call.1}
  #allocation0 [shape = 'u32[]', space=smem, size = 0x4, offset = 0x4, fixed_abs, tag = 'smem constant byte address 0x4 - core index']
  #allocation1 [shape = 'u32[144,128]{1,0:T(1,128)}', space=vmem, size = 0x12000, scoped, tag = 'internal scratch']
  #allocation2 [shape = 'f32[128,1]{1,0:T(8,128)}', space=vmem, size = 0x10000, scoped, tag = 'scratch operand']
  #allocation3 [shape = 'f32[128,1]{1,0:T(8,128)}', space=vmem, size = 0x10000, scoped, tag = 'scratch operand']
  #allocation4 [shape = 'f32[128,1]{1,0:T(8,128)}', space=vmem, size = 0x10000, scoped, tag = 'scratch operand']
  #allocation5 [shape = 'f32[128,1]{1,0:T(8,128)}', space=vmem, size = 0x10000, scoped, tag = 'scratch operand']
  %s0 = inlined_call_operand.vmem [shape: bf16[128,128], index: 0, kind: input, shape index: {}]
  %s1 = inlined_call_operand.vmem [shape: bf16[1,128,128], index: 1, kind: input, shape index: {}]
  %s2 = inlined_call_operand.vmem [shape: s32[128,1], index: 2, kind: input, shape index: {}]
  %s3 = inlined_call_operand.vmem [shape: s32[1,128], index: 3, kind: input, shape index: {}]
  %s4 = inlined_call_operand.vmem [shape: f32[128,1], index: 4, kind: output, shape index: {}]
  %s5 = sld [smem:[#allocation0]]
  $region38: #{tpu_custom_call.1} parent=0
    _
  %s7 = ssub.s32 1, %s5
  %s8 = scalar_select 0, %s7, %s5
  // Predicated region
  $region2: #{tpu_custom_call.1} parent=0 // pred_check
    _
  $region3: #{tpu_custom_call.1} parent=0 // pred_check_branch
    %10 = sbr.rel (0) target = $region5
  $region4: #{tpu_custom_call.1} parent=0 // pred_region
    _
  $region5: #{tpu_custom_call.1} parent=0 // pred_fallthru
    _
  // Predicated region
  $region6: #{tpu_custom_call.1} parent=0 // pred_check
    _
  $region7: #{tpu_custom_call.1} parent=0 // pred_check_branch
    %12 = sbr.rel (0) target = $region9
  $region8: #{tpu_custom_call.1} parent=0 // pred_region
    _
  $region9: #{tpu_custom_call.1} parent=0 // pred_fallthru
    _
  // Predicated region
  $region10: #{tpu_custom_call.1} parent=0 // pred_check
    _
  $region11: #{tpu_custom_call.1} parent=0 // pred_check_branch
    %14 = sbr.rel (0) target = $region13
  $region12: #{tpu_custom_call.1} parent=0 // pred_region
    _
  $region13: #{tpu_custom_call.1} parent=0 // pred_fallthru
    _
  // Predicated region
  $region14: #{tpu_custom_call.1} parent=0 // pred_check
    _
  $region15: #{tpu_custom_call.1} parent=0 // pred_check_branch
    %16 = sbr.rel (0) target = $region17
  $region16: #{tpu_custom_call.1} parent=0 // pred_region
    _
  $region17: #{tpu_custom_call.1} parent=0 // pred_fallthru
    _
  %p18 = scmp.eq.s32.totalorder 0, 0
  // Predicated region
  $region18: #{tpu_custom_call.1} parent=0 // pred_check
    %p19 = pneg %p18
  $region19: #{tpu_custom_call.1} parent=0 // pred_check_branch
    %21 = sbr.rel (%p19) target = $region21
  $region20: #{tpu_custom_call.1} parent=0 // pred_region
    %vm22 = vcmask 7168
    %23 = vst.msk [vmem:[#allocation2] sm:$0xff] %vm22, -inf
    %24 = vst.msk [vmem:[#allocation2 + $0x8] sm:$0xff] %vm22, -inf
    %25 = vst.msk [vmem:[#allocation2 + $0x10] sm:$0xff] %vm22, -inf
    %26 = vst.msk [vmem:[#allocation2 + $0x18] sm:$0xff] %vm22, -inf
    %27 = vst.msk [vmem:[#allocation2 + $0x20] sm:$0xff] %vm22, -inf
    %28 = vst.msk [vmem:[#allocation2 + $0x28] sm:$0xff] %vm22, -inf
    %29 = vst.msk [vmem:[#allocation2 + $0x30] sm:$0xff] %vm22, -inf
    %30 = vst.msk [vmem:[#allocation2 + $0x38] sm:$0xff] %vm22, -inf
    %31 = vst.msk [vmem:[#allocation2 + $0x40] sm:$0xff] %vm22, -inf
    %32 = vst.msk [vmem:[#allocation2 + $0x48] sm:$0xff] %vm22, -inf
    %33 = vst.msk [vmem:[#allocation2 + $0x50] sm:$0xff] %vm22, -inf
    %34 = vst.msk [vmem:[#allocation2 + $0x58] sm:$0xff] %vm22, -inf
    %35 = vst.msk [vmem:[#allocation2 + $0x60] sm:$0xff] %vm22, -inf
    %36 = vst.msk [vmem:[#allocation2 + $0x68] sm:$0xff] %vm22, -inf
    %37 = vst.msk [vmem:[#allocation2 + $0x70] sm:$0xff] %vm22, -inf
    %38 = vst.msk [vmem:[#allocation2 + $0x78] sm:$0xff] %vm22, -inf
    %39 = vst.msk [vmem:[#allocation3] sm:$0xff] %vm22, 0.0
    %40 = vst.msk [vmem:[#allocation3 + $0x8] sm:$0xff] %vm22, 0.0
    %41 = vst.msk [vmem:[#allocation3 + $0x10] sm:$0xff] %vm22, 0.0
    %42 = vst.msk [vmem:[#allocation3 + $0x18] sm:$0xff] %vm22, 0.0
    %43 = vst.msk [vmem:[#allocation3 + $0x20] sm:$0xff] %vm22, 0.0
    %44 = vst.msk [vmem:[#allocation3 + $0x28] sm:$0xff] %vm22, 0.0
    %45 = vst.msk [vmem:[#allocation3 + $0x30] sm:$0xff] %vm22, 0.0
    %46 = vst.msk [vmem:[#allocation3 + $0x38] sm:$0xff] %vm22, 0.0
    %47 = vst.msk [vmem:[#allocation3 + $0x40] sm:$0xff] %vm22, 0.0
    %48 = vst.msk [vmem:[#allocation3 + $0x48] sm:$0xff] %vm22, 0.0
    %49 = vst.msk [vmem:[#allocation3 + $0x50] sm:$0xff] %vm22, 0.0
    %50 = vst.msk [vmem:[#allocation3 + $0x58] sm:$0xff] %vm22, 0.0
    %51 = vst.msk [vmem:[#allocation3 + $0x60] sm:$0xff] %vm22, 0.0
    %52 = vst.msk [vmem:[#allocation3 + $0x68] sm:$0xff] %vm22, 0.0
    %53 = vst.msk [vmem:[#allocation3 + $0x70] sm:$0xff] %vm22, 0.0
    %54 = vst.msk [vmem:[#allocation3 + $0x78] sm:$0xff] %vm22, 0.0
    %55 = vst.msk [vmem:[#allocation4] sm:$0xff] %vm22, 0.0
    %56 = vst.msk [vmem:[#allocation4 + $0x8] sm:$0xff] %vm22, 0.0
    %57 = vst.msk [vmem:[#allocation4 + $0x10] sm:$0xff] %vm22, 0.0
    %58 = vst.msk [vmem:[#allocation4 + $0x18] sm:$0xff] %vm22, 0.0
    %59 = vst.msk [vmem:[#allocation4 + $0x20] sm:$0xff] %vm22, 0.0
    %60 = vst.msk [vmem:[#allocation4 + $0x28] sm:$0xff] %vm22, 0.0
    %61 = vst.msk [vmem:[#allocation4 + $0x30] sm:$0xff] %vm22, 0.0
    %62 = vst.msk [vmem:[#allocation4 + $0x38] sm:$0xff] %vm22, 0.0
    %63 = vst.msk [vmem:[#allocation4 + $0x40] sm:$0xff] %vm22, 0.0
    %64 = vst.msk [vmem:[#allocation4 + $0x48] sm:$0xff] %vm22, 0.0
    %65 = vst.msk [vmem:[#allocation4 + $0x50] sm:$0xff] %vm22, 0.0
    %66 = vst.msk [vmem:[#allocation4 + $0x58] sm:$0xff] %vm22, 0.0
    %67 = vst.msk [vmem:[#allocation4 + $0x60] sm:$0xff] %vm22, 0.0
    %68 = vst.msk [vmem:[#allocation4 + $0x68] sm:$0xff] %vm22, 0.0
    %69 = vst.msk [vmem:[#allocation4 + $0x70] sm:$0xff] %vm22, 0.0
    %70 = vst.msk [vmem:[#allocation4 + $0x78] sm:$0xff] %vm22, 0.0
    %71 = vst.msk [vmem:[#allocation5] sm:$0xff] %vm22, 0.0
    %72 = vst.msk [vmem:[#allocation5 + $0x8] sm:$0xff] %vm22, 0.0
    %73 = vst.msk [vmem:[#allocation5 + $0x10] sm:$0xff] %vm22, 0.0
    %74 = vst.msk [vmem:[#allocation5 + $0x18] sm:$0xff] %vm22, 0.0
    %75 = vst.msk [vmem:[#allocation5 + $0x20] sm:$0xff] %vm22, 0.0
    %76 = vst.msk [vmem:[#allocation5 + $0x28] sm:$0xff] %vm22, 0.0
    %77 = vst.msk [vmem:[#allocation5 + $0x30] sm:$0xff] %vm22, 0.0
    %78 = vst.msk [vmem:[#allocation5 + $0x38] sm:$0xff] %vm22, 0.0
    %79 = vst.msk [vmem:[#allocation5 + $0x40] sm:$0xff] %vm22, 0.0
    %80 = vst.msk [vmem:[#allocation5 + $0x48] sm:$0xff] %vm22, 0.0
    %81 = vst.msk [vmem:[#allocation5 + $0x50] sm:$0xff] %vm22, 0.0
    %82 = vst.msk [vmem:[#allocation5 + $0x58] sm:$0xff] %vm22, 0.0
    %83 = vst.msk [vmem:[#allocation5 + $0x60] sm:$0xff] %vm22, 0.0
    %84 = vst.msk [vmem:[#allocation5 + $0x68] sm:$0xff] %vm22, 0.0
    %85 = vst.msk [vmem:[#allocation5 + $0x70] sm:$0xff] %vm22, 0.0
    %86 = vst.msk [vmem:[#allocation5 + $0x78] sm:$0xff] %vm22, 0.0
  $region21: #{tpu_custom_call.1} parent=0 // pred_fallthru
    _
  %s87 = smul.u32 0, 16
  %s88 = smul.addr %s87, 4
  %s89 = scalar_lea.vmem %s1, %s88
  %v90 = vld [vmem:[%s89] sm:$0xf]
  %v91 = vld [vmem:[%s89 + $0x4] sm:$0xf]
  %v92 = vld [vmem:[%s89 + $0x8] sm:$0xf]
  %v93 = vld [vmem:[%s89 + $0xc] sm:$0xf]
  %v94 = vld [vmem:[%s89 + $0x10] sm:$0xf]
  %v95 = vld [vmem:[%s89 + $0x14] sm:$0xf]
  %v96 = vld [vmem:[%s89 + $0x18] sm:$0xf]
  %v97 = vld [vmem:[%s89 + $0x1c] sm:$0xf]
  %v98 = vld [vmem:[%s89 + $0x20] sm:$0xf]
  %v99 = vld [vmem:[%s89 + $0x24] sm:$0xf]
  %v100 = vld [vmem:[%s89 + $0x28] sm:$0xf]
  %v101 = vld [vmem:[%s89 + $0x2c] sm:$0xf]
  %v102 = vld [vmem:[%s89 + $0x30] sm:$0xf]
  %v103 = vld [vmem:[%s89 + $0x34] sm:$0xf]
  %v104 = vld [vmem:[%s89 + $0x38] sm:$0xf]
  %v105 = vld [vmem:[%s89 + $0x3c] sm:$0xf]
  %v106 = vld [vmem:[%s0] sm:$0xf]
  %v107 = vld [vmem:[%s0 + $0x4] sm:$0xf]
  %v108 = vld [vmem:[%s0 + $0x8] sm:$0xf]
  %v109 = vld [vmem:[%s0 + $0xc] sm:$0xf]
  %v110 = vld [vmem:[%s0 + $0x10] sm:$0xf]
  %v111 = vld [vmem:[%s0 + $0x14] sm:$0xf]
  %v112 = vld [vmem:[%s0 + $0x18] sm:$0xf]
  %v113 = vld [vmem:[%s0 + $0x1c] sm:$0xf]
  %v114 = vld [vmem:[%s0 + $0x20] sm:$0xf]
  %v115 = vld [vmem:[%s0 + $0x24] sm:$0xf]
  %v116 = vld [vmem:[%s0 + $0x28] sm:$0xf]
  %v117 = vld [vmem:[%s0 + $0x2c] sm:$0xf]
  %v118 = vld [vmem:[%s0 + $0x30] sm:$0xf]
  %v119 = vld [vmem:[%s0 + $0x34] sm:$0xf]
  %v120 = vld [vmem:[%s0 + $0x38] sm:$0xf]
  %v121 = vld [vmem:[%s0 + $0x3c] sm:$0xf]
  %v138 = vunpack.c.l.b16 %v106
  %v139 = vunpack.c.l.b16 %v107
  %v140 = vunpack.c.l.b16 %v108
  %v141 = vunpack.c.l.b16 %v109
  %v142 = vunpack.c.l.b16 %v110
  %v143 = vunpack.c.l.b16 %v111
  %v144 = vunpack.c.l.b16 %v112
  %v145 = vunpack.c.l.b16 %v113
  %v146 = vunpack.c.l.b16 %v114
  %v147 = vunpack.c.l.b16 %v115
  %v148 = vunpack.c.l.b16 %v116
  %v149 = vunpack.c.l.b16 %v117
  %v150 = vunpack.c.l.b16 %v118
  %v151 = vunpack.c.l.b16 %v119
  %v152 = vunpack.c.l.b16 %v120
  %v153 = vunpack.c.l.b16 %v121
  %v154 = vpack.c.b16 %v139, %v138
  %v155 = vpack.c.b16 %v141, %v140
  %v156 = vpack.c.b16 %v143, %v142
  %v157 = vpack.c.b16 %v145, %v144
  %v158 = vpack.c.b16 %v147, %v146
  %v159 = vpack.c.b16 %v149, %v148
  %v160 = vpack.c.b16 %v151, %v150
  %v161 = vpack.c.b16 %v153, %v152
  %v186 = vunpack.c.l.b16 %v90
  %v187 = vunpack.c.l.b16 %v91
  %v188 = vunpack.c.l.b16 %v92
  %v189 = vunpack.c.l.b16 %v93
  %v190 = vunpack.c.l.b16 %v94
  %v191 = vunpack.c.l.b16 %v95
  %v192 = vunpack.c.l.b16 %v96
  %v193 = vunpack.c.l.b16 %v97
  %v194 = vunpack.c.l.b16 %v98
  %v195 = vunpack.c.l.b16 %v99
  %v196 = vunpack.c.l.b16 %v100
  %v197 = vunpack.c.l.b16 %v101
  %v198 = vunpack.c.l.b16 %v102
  %v199 = vunpack.c.l.b16 %v103
  %v200 = vunpack.c.l.b16 %v104
  %v201 = vunpack.c.l.b16 %v105
  %v202 = vpack.c.b16 %v187, %v186
  %v203 = vpack.c.b16 %v189, %v188
  %v204 = vpack.c.b16 %v191, %v190
  %v205 = vpack.c.b16 %v193, %v192
  %v206 = vpack.c.b16 %v195, %v194
  %v207 = vpack.c.b16 %v197, %v196
  %v208 = vpack.c.b16 %v199, %v198
  %v209 = vpack.c.b16 %v201, %v200
  %218 = vmatprep.subr.bf16.mxu0 0
  %219 = vmatpush1.bf16.msra.mxu0 %v202
  %220 = vmatprep.subr.bf16.mxu0 0
  %221 = vmatpush1.bf16.msra.mxu0 %v203
  %222 = vmatprep.subr.bf16.mxu0 0
  %223 = vmatpush1.bf16.msra.mxu0 %v204
  %224 = vmatprep.subr.bf16.mxu0 0
  %225 = vmatpush1.bf16.msra.mxu0 %v205
  %226 = vmatprep.subr.bf16.mxu0 0
  %227 = vmatpush1.bf16.msra.mxu0 %v206
  %228 = vmatprep.subr.bf16.mxu0 0
  %229 = vmatpush1.bf16.msra.mxu0 %v207
  %230 = vmatprep.subr.bf16.mxu0 0
  %231 = vmatpush1.bf16.msra.mxu0 %v208
  %232 = vmatprep.subr.bf16.mxu0 0
  %233 = vmatpush1.bf16.msra.mxu0 %v209
  %234 = vmatprep.subr.bf16.mxu0 0
  %235 = vmatpush1.bf16.msra.mxu0 0
  %236 = vmatprep.subr.bf16.mxu0 0
  %237 = vmatpush1.bf16.msra.mxu0 0
  %238 = vmatprep.subr.bf16.mxu0 0
  %239 = vmatpush1.bf16.msra.mxu0 0
  %240 = vmatprep.subr.bf16.mxu0 0
  %241 = vmatpush1.bf16.msra.mxu0 0
  %242 = vmatprep.subr.bf16.mxu0 0
  %243 = vmatpush1.bf16.msra.mxu0 0
  %244 = vmatprep.subr.bf16.mxu0 0
  %245 = vmatpush1.bf16.msra.mxu0 0
  %246 = vmatprep.subr.bf16.mxu0 0
  %247 = vmatpush1.bf16.msra.mxu0 0
  %248 = vmatprep.subr.bf16.mxu0 0
  %249 = vmatpush1.bf16.msra.mxu0 0
  %250 = vmatprep.mubr.bf16.mxu0 0
  %251 = vmatmul.mubr.bf16.gmra.mrb[0].mxu0 %v154
  %v252 = vpop.f32.mrb[0].mxu0
  %v253 = vadd.f32 0.0, %v252
  %v254 = vpop.f32.mrb[0].mxu0
  %v255 = vpop.f32.mrb[0].mxu0
  %v256 = vadd.f32 0.0, %v255
  %v257 = vpop.f32.mrb[0].mxu0
  %258 = vmatprep.mubr.bf16.mxu0 0
  %259 = vmatmul.mubr.bf16.gmra.mrb[0].mxu0 %v155
  %v260 = vpop.f32.mrb[0].mxu0
  %v261 = vadd.f32 0.0, %v260
  %v262 = vpop.f32.mrb[0].mxu0
  %v263 = vpop.f32.mrb[0].mxu0
  %v264 = vadd.f32 0.0, %v263
  %v265 = vpop.f32.mrb[0].mxu0
  %266 = vmatprep.mubr.bf16.mxu0 0
  %267 = vmatmul.mubr.bf16.gmra.mrb[0].mxu0 %v156
  %v268 = vpop.f32.mrb[0].mxu0
  %v269 = vadd.f32 0.0, %v268
  %v270 = vpop.f32.mrb[0].mxu0
  %v271 = vpop.f32.mrb[0].mxu0
  %v272 = vadd.f32 0.0, %v271
  %v273 = vpop.f32.mrb[0].mxu0
  %274 = vmatprep.mubr.bf16.mxu0 0
  %275 = vmatmul.mubr.bf16.gmra.mrb[0].mxu0 %v157
  %v276 = vpop.f32.mrb[0].mxu0
  %v277 = vadd.f32 0.0, %v276
  %v278 = vpop.f32.mrb[0].mxu0
  %v279 = vpop.f32.mrb[0].mxu0
  %v280 = vadd.f32 0.0, %v279
  %v281 = vpop.f32.mrb[0].mxu0
  %282 = vmatprep.mubr.bf16.mxu0 0
  %283 = vmatmul.mubr.bf16.gmra.mrb[0].mxu0 %v158
  %v284 = vpop.f32.mrb[0].mxu0
  %v285 = vadd.f32 0.0, %v284
  %v286 = vpop.f32.mrb[0].mxu0
  %v287 = vpop.f32.mrb[0].mxu0
  %v288 = vadd.f32 0.0, %v287
  %v289 = vpop.f32.mrb[0].mxu0
  %290 = vmatprep.mubr.bf16.mxu0 0
  %291 = vmatmul.mubr.bf16.gmra.mrb[0].mxu0 %v159
  %v292 = vpop.f32.mrb[0].mxu0
  %v293 = vadd.f32 0.0, %v292
  %v294 = vpop.f32.mrb[0].mxu0
  %v295 = vpop.f32.mrb[0].mxu0
  %v296 = vadd.f32 0.0, %v295
  %v297 = vpop.f32.mrb[0].mxu0
  %298 = vmatprep.mubr.bf16.mxu0 0
  %299 = vmatmul.mubr.bf16.gmra.mrb[0].mxu0 %v160
  %v300 = vpop.f32.mrb[0].mxu0
  %v301 = vadd.f32 0.0, %v300
  %v302 = vpop.f32.mrb[0].mxu0
  %v303 = vpop.f32.mrb[0].mxu0
  %v304 = vadd.f32 0.0, %v303
  %v305 = vpop.f32.mrb[0].mxu0
  %306 = vmatprep.mubr.bf16.mxu0 0
  %307 = vmatmul.mubr.bf16.gmra.mrb[0].mxu0 %v161
  %v308 = vpop.f32.mrb[0].mxu0
  %v309 = vadd.f32 0.0, %v308
  %v310 = vpop.f32.mrb[0].mxu0
  %v311 = vpop.f32.mrb[0].mxu0
  %v312 = vadd.f32 0.0, %v311
  %v313 = vpop.f32.mrb[0].mxu0
  %314 = vdwg.mxu0
  %v315 = vmul.f32 %v253, 14.285714
  %v316 = vmul.f32 %v256, 14.285714
  %v317 = vmul.f32 %v261, 14.285714
  %v318 = vmul.f32 %v264, 14.285714
  %v319 = vmul.f32 %v269, 14.285714
  %v320 = vmul.f32 %v272, 14.285714
  %v321 = vmul.f32 %v277, 14.285714
  %v322 = vmul.f32 %v280, 14.285714
  %v323 = vmul.f32 %v285, 14.285714
  %v324 = vmul.f32 %v288, 14.285714
  %v325 = vmul.f32 %v293, 14.285714
  %v326 = vmul.f32 %v296, 14.285714
  %v327 = vmul.f32 %v301, 14.285714
  %v328 = vmul.f32 %v304, 14.285714
  %v329 = vmul.f32 %v309, 14.285714
  %v330 = vmul.f32 %v312, 14.285714
  %v331 = vld [vmem:[%s2] sm:$0xff]
  %v332 = vld [vmem:[%s2 + $0x8] sm:$0xff]
  %v333 = vld [vmem:[%s2 + $0x10] sm:$0xff]
  %v334 = vld [vmem:[%s2 + $0x18] sm:$0xff]
  %v335 = vld [vmem:[%s2 + $0x20] sm:$0xff]
  %v336 = vld [vmem:[%s2 + $0x28] sm:$0xff]
  %v337 = vld [vmem:[%s2 + $0x30] sm:$0xff]
  %v338 = vld [vmem:[%s2 + $0x38] sm:$0xff]
  %v339 = vld [vmem:[%s2 + $0x40] sm:$0xff]
  %v340 = vld [vmem:[%s2 + $0x48] sm:$0xff]
  %v341 = vld [vmem:[%s2 + $0x50] sm:$0xff]
  %v342 = vld [vmem:[%s2 + $0x58] sm:$0xff]
  %v343 = vld [vmem:[%s2 + $0x60] sm:$0xff]
  %v344 = vld [vmem:[%s2 + $0x68] sm:$0xff]
  %v345 = vld [vmem:[%s2 + $0x70] sm:$0xff]
  %v346 = vld [vmem:[%s2 + $0x78] sm:$0xff]
  %v347 = vld [vmem:[%s3] sm:$0x1]
  %348 = vset.pattern.permute.xlu0 0
  %349 = vperm.xlu0 %348, %v331
  %v350 = vpop.permute.xlu0 %349
  %351 = vset.pattern.permute.xlu0 0
  %352 = vperm.xlu0 %351, %v332
  %v353 = vpop.permute.xlu0 %352
  %354 = vset.pattern.permute.xlu0 0
  %355 = vperm.xlu0 %354, %v333
  %v356 = vpop.permute.xlu0 %355
  %357 = vset.pattern.permute.xlu0 0
  %358 = vperm.xlu0 %357, %v334
  %v359 = vpop.permute.xlu0 %358
  %360 = vset.pattern.permute.xlu0 0
  %361 = vperm.xlu0 %360, %v335
  %v362 = vpop.permute.xlu0 %361
  %363 = vset.pattern.permute.xlu0 0
  %364 = vperm.xlu0 %363, %v336
  %v365 = vpop.permute.xlu0 %364
  %366 = vset.pattern.permute.xlu0 0
  %367 = vperm.xlu0 %366, %v337
  %v368 = vpop.permute.xlu0 %367
  %369 = vset.pattern.permute.xlu0 0
  %370 = vperm.xlu0 %369, %v338
  %v371 = vpop.permute.xlu0 %370
  %372 = vset.pattern.permute.xlu0 0
  %373 = vperm.xlu0 %372, %v339
  %v374 = vpop.permute.xlu0 %373
  %375 = vset.pattern.permute.xlu0 0
  %376 = vperm.xlu0 %375, %v340
  %v377 = vpop.permute.xlu0 %376
  %378 = vset.pattern.permute.xlu0 0
  %379 = vperm.xlu0 %378, %v341
  %v380 = vpop.permute.xlu0 %379
  %381 = vset.pattern.permute.xlu0 0
  %382 = vperm.xlu0 %381, %v342
  %v383 = vpop.permute.xlu0 %382
  %384 = vset.pattern.permute.xlu0 0
  %385 = vperm.xlu0 %384, %v343
  %v386 = vpop.permute.xlu0 %385
  %387 = vset.pattern.permute.xlu0 0
  %388 = vperm.xlu0 %387, %v344
  %v389 = vpop.permute.xlu0 %388
  %390 = vset.pattern.permute.xlu0 0
  %391 = vperm.xlu0 %390, %v345
  %v392 = vpop.permute.xlu0 %391
  %393 = vset.pattern.permute.xlu0 0
  %394 = vperm.xlu0 %393, %v346
  %v395 = vpop.permute.xlu0 %394
  %v396 = vlaneseq
  %v397 = vshrl.u32 %v396, 7
  %v398 = vsub.s32 0, %v397
  %v399 = vrot.slane %v347, %v398
  %vm400 = vcmp.eq.s32.totalorder %v350, %v399
  %vm401 = vcmp.eq.s32.totalorder %v353, %v399
  %vm402 = vcmp.eq.s32.totalorder %v356, %v399
  %vm403 = vcmp.eq.s32.totalorder %v359, %v399
  %vm404 = vcmp.eq.s32.totalorder %v362, %v399
  %vm405 = vcmp.eq.s32.totalorder %v365, %v399
  %vm406 = vcmp.eq.s32.totalorder %v368, %v399
  %vm407 = vcmp.eq.s32.totalorder %v371, %v399
  %vm408 = vcmp.eq.s32.totalorder %v374, %v399
  %vm409 = vcmp.eq.s32.totalorder %v377, %v399
  %vm410 = vcmp.eq.s32.totalorder %v380, %v399
  %vm411 = vcmp.eq.s32.totalorder %v383, %v399
  %vm412 = vcmp.eq.s32.totalorder %v386, %v399
  %vm413 = vcmp.eq.s32.totalorder %v389, %v399
  %vm414 = vcmp.eq.s32.totalorder %v392, %v399
  %vm415 = vcmp.eq.s32.totalorder %v395, %v399
  %v416 = vld [vmem:[#allocation2] sm:$0xff]
  %v417 = vld [vmem:[#allocation2 + $0x8] sm:$0xff]
  %v418 = vld [vmem:[#allocation2 + $0x10] sm:$0xff]
  %v419 = vld [vmem:[#allocation2 + $0x18] sm:$0xff]
  %v420 = vld [vmem:[#allocation2 + $0x20] sm:$0xff]
  %v421 = vld [vmem:[#allocation2 + $0x28] sm:$0xff]
  %v422 = vld [vmem:[#allocation2 + $0x30] sm:$0xff]
  %v423 = vld [vmem:[#allocation2 + $0x38] sm:$0xff]
  %v424 = vld [vmem:[#allocation2 + $0x40] sm:$0xff]
  %v425 = vld [vmem:[#allocation2 + $0x48] sm:$0xff]
  %v426 = vld [vmem:[#allocation2 + $0x50] sm:$0xff]
  %v427 = vld [vmem:[#allocation2 + $0x58] sm:$0xff]
  %v428 = vld [vmem:[#allocation2 + $0x60] sm:$0xff]
  %v429 = vld [vmem:[#allocation2 + $0x68] sm:$0xff]
  %v430 = vld [vmem:[#allocation2 + $0x70] sm:$0xff]
  %v431 = vld [vmem:[#allocation2 + $0x78] sm:$0xff]
  %432 = vmax.xlane.f32.xlu0 %v315
  %v433 = vpop.xlane.xlu0 %432
  %434 = vmax.xlane.f32.xlu0 %v316
  %v435 = vpop.xlane.xlu0 %434
  %436 = vmax.xlane.f32.xlu0 %v317
  %v437 = vpop.xlane.xlu0 %436
  %438 = vmax.xlane.f32.xlu0 %v318
  %v439 = vpop.xlane.xlu0 %438
  %440 = vmax.xlane.f32.xlu0 %v319
  %v441 = vpop.xlane.xlu0 %440
  %442 = vmax.xlane.f32.xlu0 %v320
  %v443 = vpop.xlane.xlu0 %442
  %444 = vmax.xlane.f32.xlu0 %v321
  %v445 = vpop.xlane.xlu0 %444
  %446 = vmax.xlane.f32.xlu0 %v322
  %v447 = vpop.xlane.xlu0 %446
  %448 = vmax.xlane.f32.xlu0 %v323
  %v449 = vpop.xlane.xlu0 %448
  %450 = vmax.xlane.f32.xlu0 %v324
  %v451 = vpop.xlane.xlu0 %450
  %452 = vmax.xlane.f32.xlu0 %v325
  %v453 = vpop.xlane.xlu0 %452
  %454 = vmax.xlane.f32.xlu0 %v326
  %v455 = vpop.xlane.xlu0 %454
  %456 = vmax.xlane.f32.xlu0 %v327
  %v457 = vpop.xlane.xlu0 %456
  %458 = vmax.xlane.f32.xlu0 %v328
  %v459 = vpop.xlane.xlu0 %458
  %460 = vmax.xlane.f32.xlu0 %v329
  %v461 = vpop.xlane.xlu0 %460
  %462 = vmax.xlane.f32.xlu0 %v330
  %v463 = vpop.xlane.xlu0 %462
  %v464 = vmax.f32 %v416, %v433
  %v465 = vmax.f32 %v417, %v435
  %v466 = vmax.f32 %v418, %v437
  %v467 = vmax.f32 %v419, %v439
  %v468 = vmax.f32 %v420, %v441
  %v469 = vmax.f32 %v421, %v443
  %v470 = vmax.f32 %v422, %v445
  %v471 = vmax.f32 %v423, %v447
  %v472 = vmax.f32 %v424, %v449
  %v473 = vmax.f32 %v425, %v451
  %v474 = vmax.f32 %v426, %v453
  %v475 = vmax.f32 %v427, %v455
  %v476 = vmax.f32 %v428, %v457
  %v477 = vmax.f32 %v429, %v459
  %v478 = vmax.f32 %v430, %v461
  %v479 = vmax.f32 %v431, %v463
  %v480 = vsub.f32 %v416, %v464
  %v481 = vsub.f32 %v417, %v465
  %v482 = vsub.f32 %v418, %v466
  %v483 = vsub.f32 %v419, %v467
  %v484 = vsub.f32 %v420, %v468
  %v485 = vsub.f32 %v421, %v469
  %v486 = vsub.f32 %v422, %v470
  %v487 = vsub.f32 %v423, %v471
  %v488 = vsub.f32 %v424, %v472
  %v489 = vsub.f32 %v425, %v473
  %v490 = vsub.f32 %v426, %v474
  %v491 = vsub.f32 %v427, %v475
  %v492 = vsub.f32 %v428, %v476
  %v493 = vsub.f32 %v429, %v477
  %v494 = vsub.f32 %v430, %v478
  %v495 = vsub.f32 %v431, %v479
  %v496 = vmul.f32 %v480, 1.442695
  %v497 = vpow.pop %v496
  %v498 = vmul.f32 %v481, 1.442695
  %v499 = vpow.pop %v498
  %v500 = vmul.f32 %v482, 1.442695
  %v501 = vpow.pop %v500
  %v502 = vmul.f32 %v483, 1.442695
  %v503 = vpow.pop %v502
  %v504 = vmul.f32 %v484, 1.442695
  %v505 = vpow.pop %v504
  %v506 = vmul.f32 %v485, 1.442695
  %v507 = vpow.pop %v506
  %v508 = vmul.f32 %v486, 1.442695
  %v509 = vpow.pop %v508
  %v510 = vmul.f32 %v487, 1.442695
  %v511 = vpow.pop %v510
  %v512 = vmul.f32 %v488, 1.442695
  %v513 = vpow.pop %v512
  %v514 = vmul.f32 %v489, 1.442695
  %v515 = vpow.pop %v514
  %v516 = vmul.f32 %v490, 1.442695
  %v517 = vpow.pop %v516
  %v518 = vmul.f32 %v491, 1.442695
  %v519 = vpow.pop %v518
  %v520 = vmul.f32 %v492, 1.442695
  %v521 = vpow.pop %v520
  %v522 = vmul.f32 %v493, 1.442695
  %v523 = vpow.pop %v522
  %v524 = vmul.f32 %v494, 1.442695
  %v525 = vpow.pop %v524
  %v526 = vmul.f32 %v495, 1.442695
  %v527 = vpow.pop %v526
  %529 = vset.pattern.permute.xlu0 0
  %530 = vperm.xlu0 %529, %v464
  %v531 = vpop.permute.xlu0 %530
  %534 = vset.pattern.permute.xlu0 0
  %535 = vperm.xlu0 %534, %v465
  %v536 = vpop.permute.xlu0 %535
  %539 = vset.pattern.permute.xlu0 0
  %540 = vperm.xlu0 %539, %v466
  %v541 = vpop.permute.xlu0 %540
  %544 = vset.pattern.permute.xlu0 0
  %545 = vperm.xlu0 %544, %v467
  %v546 = vpop.permute.xlu0 %545
  %549 = vset.pattern.permute.xlu0 0
  %550 = vperm.xlu0 %549, %v468
  %v551 = vpop.permute.xlu0 %550
  %554 = vset.pattern.permute.xlu0 0
  %555 = vperm.xlu0 %554, %v469
  %v556 = vpop.permute.xlu0 %555
  %559 = vset.pattern.permute.xlu0 0
  %560 = vperm.xlu0 %559, %v470
  %v561 = vpop.permute.xlu0 %560
  %564 = vset.pattern.permute.xlu0 0
  %565 = vperm.xlu0 %564, %v471
  %v566 = vpop.permute.xlu0 %565
  %569 = vset.pattern.permute.xlu0 0
  %570 = vperm.xlu0 %569, %v472
  %v571 = vpop.permute.xlu0 %570
  %574 = vset.pattern.permute.xlu0 0
  %575 = vperm.xlu0 %574, %v473
  %v576 = vpop.permute.xlu0 %575
  %579 = vset.pattern.permute.xlu0 0
  %580 = vperm.xlu0 %579, %v474
  %v581 = vpop.permute.xlu0 %580
  %584 = vset.pattern.permute.xlu0 0
  %585 = vperm.xlu0 %584, %v475
  %v586 = vpop.permute.xlu0 %585
  %589 = vset.pattern.permute.xlu0 0
  %590 = vperm.xlu0 %589, %v476
  %v591 = vpop.permute.xlu0 %590
  %594 = vset.pattern.permute.xlu0 0
  %595 = vperm.xlu0 %594, %v477
  %v596 = vpop.permute.xlu0 %595
  %599 = vset.pattern.permute.xlu0 0
  %600 = vperm.xlu0 %599, %v478
  %v601 = vpop.permute.xlu0 %600
  %604 = vset.pattern.permute.xlu0 0
  %605 = vperm.xlu0 %604, %v479
  %v606 = vpop.permute.xlu0 %605
  %v608 = vsub.f32 %v315, %v531
  %v609 = vsub.f32 %v316, %v536
  %v610 = vsub.f32 %v317, %v541
  %v611 = vsub.f32 %v318, %v546
  %v612 = vsub.f32 %v319, %v551
  %v613 = vsub.f32 %v320, %v556
  %v614 = vsub.f32 %v321, %v561
  %v615 = vsub.f32 %v322, %v566
  %v616 = vsub.f32 %v323, %v571
  %v617 = vsub.f32 %v324, %v576
  %v618 = vsub.f32 %v325, %v581
  %v619 = vsub.f32 %v326, %v586
  %v620 = vsub.f32 %v327, %v591
  %v621 = vsub.f32 %v328, %v596
  %v622 = vsub.f32 %v329, %v601
  %v623 = vsub.f32 %v330, %v606
  %v624 = vmul.f32 %v608, 1.442695
  %v625 = vpow.pop %v624
  %v626 = vmul.f32 %v609, 1.442695
  %v627 = vpow.pop %v626
  %v628 = vmul.f32 %v610, 1.442695
  %v629 = vpow.pop %v628
  %v630 = vmul.f32 %v611, 1.442695
  %v631 = vpow.pop %v630
  %v632 = vmul.f32 %v612, 1.442695
  %v633 = vpow.pop %v632
  %v634 = vmul.f32 %v613, 1.442695
  %v635 = vpow.pop %v634
  %v636 = vmul.f32 %v614, 1.442695
  %v637 = vpow.pop %v636
  %v638 = vmul.f32 %v615, 1.442695
  %v639 = vpow.pop %v638
  %v640 = vmul.f32 %v616, 1.442695
  %v641 = vpow.pop %v640
  %v642 = vmul.f32 %v617, 1.442695
  %v643 = vpow.pop %v642
  %v644 = vmul.f32 %v618, 1.442695
  %v645 = vpow.pop %v644
  %v646 = vmul.f32 %v619, 1.442695
  %v647 = vpow.pop %v646
  %v648 = vmul.f32 %v620, 1.442695
  %v649 = vpow.pop %v648
  %v650 = vmul.f32 %v621, 1.442695
  %v651 = vpow.pop %v650
  %v652 = vmul.f32 %v622, 1.442695
  %v653 = vpow.pop %v652
  %v654 = vmul.f32 %v623, 1.442695
  %v655 = vpow.pop %v654
  %v656 = vld [vmem:[#allocation3] sm:$0xff]
  %v657 = vld [vmem:[#allocation3 + $0x8] sm:$0xff]
  %v658 = vld [vmem:[#allocation3 + $0x10] sm:$0xff]
  %v659 = vld [vmem:[#allocation3 + $0x18] sm:$0xff]
  %v660 = vld [vmem:[#allocation3 + $0x20] sm:$0xff]
  %v661 = vld [vmem:[#allocation3 + $0x28] sm:$0xff]
  %v662 = vld [vmem:[#allocation3 + $0x30] sm:$0xff]
  %v663 = vld [vmem:[#allocation3 + $0x38] sm:$0xff]
  %v664 = vld [vmem:[#allocation3 + $0x40] sm:$0xff]
  %v665 = vld [vmem:[#allocation3 + $0x48] sm:$0xff]
  %v666 = vld [vmem:[#allocation3 + $0x50] sm:$0xff]
  %v667 = vld [vmem:[#allocation3 + $0x58] sm:$0xff]
  %v668 = vld [vmem:[#allocation3 + $0x60] sm:$0xff]
  %v669 = vld [vmem:[#allocation3 + $0x68] sm:$0xff]
  %v670 = vld [vmem:[#allocation3 + $0x70] sm:$0xff]
  %v671 = vld [vmem:[#allocation3 + $0x78] sm:$0xff]
  %v672 = vmul.f32 %v497, %v656
  %v673 = vmul.f32 %v499, %v657
  %v674 = vmul.f32 %v501, %v658
  %v675 = vmul.f32 %v503, %v659
  %v676 = vmul.f32 %v505, %v660
  %v677 = vmul.f32 %v507, %v661
  %v678 = vmul.f32 %v509, %v662
  %v679 = vmul.f32 %v511, %v663
  %v680 = vmul.f32 %v513, %v664
  %v681 = vmul.f32 %v515, %v665
  %v682 = vmul.f32 %v517, %v666
  %v683 = vmul.f32 %v519, %v667
  %v684 = vmul.f32 %v521, %v668
  %v685 = vmul.f32 %v523, %v669
  %v686 = vmul.f32 %v525, %v670
  %v687 = vmul.f32 %v527, %v671
  %688 = vadd.xlane.f32.xlu0 %v625
  %v689 = vpop.xlane.xlu0 %688
  %690 = vadd.xlane.f32.xlu0 %v627
  %v691 = vpop.xlane.xlu0 %690
  %692 = vadd.xlane.f32.xlu0 %v629
  %v693 = vpop.xlane.xlu0 %692
  %694 = vadd.xlane.f32.xlu0 %v631
  %v695 = vpop.xlane.xlu0 %694
  %696 = vadd.xlane.f32.xlu0 %v633
  %v697 = vpop.xlane.xlu0 %696
  %698 = vadd.xlane.f32.xlu0 %v635
  %v699 = vpop.xlane.xlu0 %698
  %700 = vadd.xlane.f32.xlu0 %v637
  %v701 = vpop.xlane.xlu0 %700
  %702 = vadd.xlane.f32.xlu0 %v639
  %v703 = vpop.xlane.xlu0 %702
  %704 = vadd.xlane.f32.xlu0 %v641
  %v705 = vpop.xlane.xlu0 %704
  %706 = vadd.xlane.f32.xlu0 %v643
  %v707 = vpop.xlane.xlu0 %706
  %708 = vadd.xlane.f32.xlu0 %v645
  %v709 = vpop.xlane.xlu0 %708
  %710 = vadd.xlane.f32.xlu0 %v647
  %v711 = vpop.xlane.xlu0 %710
  %712 = vadd.xlane.f32.xlu0 %v649
  %v713 = vpop.xlane.xlu0 %712
  %714 = vadd.xlane.f32.xlu0 %v651
  %v715 = vpop.xlane.xlu0 %714
  %716 = vadd.xlane.f32.xlu0 %v653
  %v717 = vpop.xlane.xlu0 %716
  %718 = vadd.xlane.f32.xlu0 %v655
  %v719 = vpop.xlane.xlu0 %718
  %v720 = vadd.f32 %v672, %v689
  %v721 = vadd.f32 %v673, %v691
  %v722 = vadd.f32 %v674, %v693
  %v723 = vadd.f32 %v675, %v695
  %v724 = vadd.f32 %v676, %v697
  %v725 = vadd.f32 %v677, %v699
  %v726 = vadd.f32 %v678, %v701
  %v727 = vadd.f32 %v679, %v703
  %v728 = vadd.f32 %v680, %v705
  %v729 = vadd.f32 %v681, %v707
  %v730 = vadd.f32 %v682, %v709
  %v731 = vadd.f32 %v683, %v711
  %v732 = vadd.f32 %v684, %v713
  %v733 = vadd.f32 %v685, %v715
  %v734 = vadd.f32 %v686, %v717
  %v735 = vadd.f32 %v687, %v719
  %vm736 = vcmask 7168
  %737 = vst.msk [vmem:[#allocation3] sm:$0xff] %vm736, %v720
  %738 = vst.msk [vmem:[#allocation3 + $0x8] sm:$0xff] %vm736, %v721
  %739 = vst.msk [vmem:[#allocation3 + $0x10] sm:$0xff] %vm736, %v722
  %740 = vst.msk [vmem:[#allocation3 + $0x18] sm:$0xff] %vm736, %v723
  %741 = vst.msk [vmem:[#allocation3 + $0x20] sm:$0xff] %vm736, %v724
  %742 = vst.msk [vmem:[#allocation3 + $0x28] sm:$0xff] %vm736, %v725
  %743 = vst.msk [vmem:[#allocation3 + $0x30] sm:$0xff] %vm736, %v726
  %744 = vst.msk [vmem:[#allocation3 + $0x38] sm:$0xff] %vm736, %v727
  %745 = vst.msk [vmem:[#allocation3 + $0x40] sm:$0xff] %vm736, %v728
  %746 = vst.msk [vmem:[#allocation3 + $0x48] sm:$0xff] %vm736, %v729
  %747 = vst.msk [vmem:[#allocation3 + $0x50] sm:$0xff] %vm736, %v730
  %748 = vst.msk [vmem:[#allocation3 + $0x58] sm:$0xff] %vm736, %v731
  %749 = vst.msk [vmem:[#allocation3 + $0x60] sm:$0xff] %vm736, %v732
  %750 = vst.msk [vmem:[#allocation3 + $0x68] sm:$0xff] %vm736, %v733
  %751 = vst.msk [vmem:[#allocation3 + $0x70] sm:$0xff] %vm736, %v734
  %752 = vst.msk [vmem:[#allocation3 + $0x78] sm:$0xff] %vm736, %v735
  %753 = vst.msk [vmem:[#allocation2] sm:$0xff] %vm736, %v464
  %754 = vst.msk [vmem:[#allocation2 + $0x8] sm:$0xff] %vm736, %v465
  %755 = vst.msk [vmem:[#allocation2 + $0x10] sm:$0xff] %vm736, %v466
  %756 = vst.msk [vmem:[#allocation2 + $0x18] sm:$0xff] %vm736, %v467
  %757 = vst.msk [vmem:[#allocation2 + $0x20] sm:$0xff] %vm736, %v468
  %758 = vst.msk [vmem:[#allocation2 + $0x28] sm:$0xff] %vm736, %v469
  %759 = vst.msk [vmem:[#allocation2 + $0x30] sm:$0xff] %vm736, %v470
  %760 = vst.msk [vmem:[#allocation2 + $0x38] sm:$0xff] %vm736, %v471
  %761 = vst.msk [vmem:[#allocation2 + $0x40] sm:$0xff] %vm736, %v472
  %762 = vst.msk [vmem:[#allocation2 + $0x48] sm:$0xff] %vm736, %v473
  %763 = vst.msk [vmem:[#allocation2 + $0x50] sm:$0xff] %vm736, %v474
  %764 = vst.msk [vmem:[#allocation2 + $0x58] sm:$0xff] %vm736, %v475
  %765 = vst.msk [vmem:[#allocation2 + $0x60] sm:$0xff] %vm736, %v476
  %766 = vst.msk [vmem:[#allocation2 + $0x68] sm:$0xff] %vm736, %v477
  %767 = vst.msk [vmem:[#allocation2 + $0x70] sm:$0xff] %vm736, %v478
  %768 = vst.msk [vmem:[#allocation2 + $0x78] sm:$0xff] %vm736, %v479
  %v769 = vld [vmem:[#allocation4] sm:$0xff]
  %v770 = vld [vmem:[#allocation4 + $0x8] sm:$0xff]
  %v771 = vld [vmem:[#allocation4 + $0x10] sm:$0xff]
  %v772 = vld [vmem:[#allocation4 + $0x18] sm:$0xff]
  %v773 = vld [vmem:[#allocation4 + $0x20] sm:$0xff]
  %v774 = vld [vmem:[#allocation4 + $0x28] sm:$0xff]
  %v775 = vld [vmem:[#allocation4 + $0x30] sm:$0xff]
  %v776 = vld [vmem:[#allocation4 + $0x38] sm:$0xff]
  %v777 = vld [vmem:[#allocation4 + $0x40] sm:$0xff]
  %v778 = vld [vmem:[#allocation4 + $0x48] sm:$0xff]
  %v779 = vld [vmem:[#allocation4 + $0x50] sm:$0xff]
  %v780 = vld [vmem:[#allocation4 + $0x58] sm:$0xff]
  %v781 = vld [vmem:[#allocation4 + $0x60] sm:$0xff]
  %v782 = vld [vmem:[#allocation4 + $0x68] sm:$0xff]
  %v783 = vld [vmem:[#allocation4 + $0x70] sm:$0xff]
  %v784 = vld [vmem:[#allocation4 + $0x78] sm:$0xff]
  %v785 = vsel %vm400, %v315, 0.0
  %v786 = vsel %vm401, %v316, 0.0
  %v787 = vsel %vm402, %v317, 0.0
  %v788 = vsel %vm403, %v318, 0.0
  %v789 = vsel %vm404, %v319, 0.0
  %v790 = vsel %vm405, %v320, 0.0
  %v791 = vsel %vm406, %v321, 0.0
  %v792 = vsel %vm407, %v322, 0.0
  %v793 = vsel %vm408, %v323, 0.0
  %v794 = vsel %vm409, %v324, 0.0
  %v795 = vsel %vm410, %v325, 0.0
  %v796 = vsel %vm411, %v326, 0.0
  %v797 = vsel %vm412, %v327, 0.0
  %v798 = vsel %vm413, %v328, 0.0
  %v799 = vsel %vm414, %v329, 0.0
  %v800 = vsel %vm415, %v330, 0.0
  %801 = vadd.xlane.f32.xlu0 %v785
  %v802 = vpop.xlane.xlu0 %801
  %803 = vadd.xlane.f32.xlu0 %v786
  %v804 = vpop.xlane.xlu0 %803
  %805 = vadd.xlane.f32.xlu0 %v787
  %v806 = vpop.xlane.xlu0 %805
  %807 = vadd.xlane.f32.xlu0 %v788
  %v808 = vpop.xlane.xlu0 %807
  %809 = vadd.xlane.f32.xlu0 %v789
  %v810 = vpop.xlane.xlu0 %809
  %811 = vadd.xlane.f32.xlu0 %v790
  %v812 = vpop.xlane.xlu0 %811
  %813 = vadd.xlane.f32.xlu0 %v791
  %v814 = vpop.xlane.xlu0 %813
  %815 = vadd.xlane.f32.xlu0 %v792
  %v816 = vpop.xlane.xlu0 %815
  %817 = vadd.xlane.f32.xlu0 %v793
  %v818 = vpop.xlane.xlu0 %817
  %819 = vadd.xlane.f32.xlu0 %v794
  %v820 = vpop.xlane.xlu0 %819
  %821 = vadd.xlane.f32.xlu0 %v795
  %v822 = vpop.xlane.xlu0 %821
  %823 = vadd.xlane.f32.xlu0 %v796
  %v824 = vpop.xlane.xlu0 %823
  %825 = vadd.xlane.f32.xlu0 %v797
  %v826 = vpop.xlane.xlu0 %825
  %827 = vadd.xlane.f32.xlu0 %v798
  %v828 = vpop.xlane.xlu0 %827
  %829 = vadd.xlane.f32.xlu0 %v799
  %v830 = vpop.xlane.xlu0 %829
  %831 = vadd.xlane.f32.xlu0 %v800
  %v832 = vpop.xlane.xlu0 %831
  %v833 = vadd.f32 %v769, %v802
  %v834 = vadd.f32 %v770, %v804
  %v835 = vadd.f32 %v771, %v806
  %v836 = vadd.f32 %v772, %v808
  %v837 = vadd.f32 %v773, %v810
  %v838 = vadd.f32 %v774, %v812
  %v839 = vadd.f32 %v775, %v814
  %v840 = vadd.f32 %v776, %v816
  %v841 = vadd.f32 %v777, %v818
  %v842 = vadd.f32 %v778, %v820
  %v843 = vadd.f32 %v779, %v822
  %v844 = vadd.f32 %v780, %v824
  %v845 = vadd.f32 %v781, %v826
  %v846 = vadd.f32 %v782, %v828
  %v847 = vadd.f32 %v783, %v830
  %v848 = vadd.f32 %v784, %v832
  %849 = vst.msk [vmem:[#allocation4] sm:$0xff] %vm736, %v833
  %850 = vst.msk [vmem:[#allocation4 + $0x8] sm:$0xff] %vm736, %v834
  %851 = vst.msk [vmem:[#allocation4 + $0x10] sm:$0xff] %vm736, %v835
  %852 = vst.msk [vmem:[#allocation4 + $0x18] sm:$0xff] %vm736, %v836
  %853 = vst.msk [vmem:[#allocation4 + $0x20] sm:$0xff] %vm736, %v837
  %854 = vst.msk [vmem:[#allocation4 + $0x28] sm:$0xff] %vm736, %v838
  %855 = vst.msk [vmem:[#allocation4 + $0x30] sm:$0xff] %vm736, %v839
  %856 = vst.msk [vmem:[#allocation4 + $0x38] sm:$0xff] %vm736, %v840
  %857 = vst.msk [vmem:[#allocation4 + $0x40] sm:$0xff] %vm736, %v841
  %858 = vst.msk [vmem:[#allocation4 + $0x48] sm:$0xff] %vm736, %v842
  %859 = vst.msk [vmem:[#allocation4 + $0x50] sm:$0xff] %vm736, %v843
  %860 = vst.msk [vmem:[#allocation4 + $0x58] sm:$0xff] %vm736, %v844
  %861 = vst.msk [vmem:[#allocation4 + $0x60] sm:$0xff] %vm736, %v845
  %862 = vst.msk [vmem:[#allocation4 + $0x68] sm:$0xff] %vm736, %v846
  %863 = vst.msk [vmem:[#allocation4 + $0x70] sm:$0xff] %vm736, %v847
  %864 = vst.msk [vmem:[#allocation4 + $0x78] sm:$0xff] %vm736, %v848
  %v865 = vld [vmem:[#allocation5] sm:$0xff]
  %v866 = vld [vmem:[#allocation5 + $0x8] sm:$0xff]
  %v867 = vld [vmem:[#allocation5 + $0x10] sm:$0xff]
  %v868 = vld [vmem:[#allocation5 + $0x18] sm:$0xff]
  %v869 = vld [vmem:[#allocation5 + $0x20] sm:$0xff]
  %v870 = vld [vmem:[#allocation5 + $0x28] sm:$0xff]
  %v871 = vld [vmem:[#allocation5 + $0x30] sm:$0xff]
  %v872 = vld [vmem:[#allocation5 + $0x38] sm:$0xff]
  %v873 = vld [vmem:[#allocation5 + $0x40] sm:$0xff]
  %v874 = vld [vmem:[#allocation5 + $0x48] sm:$0xff]
  %v875 = vld [vmem:[#allocation5 + $0x50] sm:$0xff]
  %v876 = vld [vmem:[#allocation5 + $0x58] sm:$0xff]
  %v877 = vld [vmem:[#allocation5 + $0x60] sm:$0xff]
  %v878 = vld [vmem:[#allocation5 + $0x68] sm:$0xff]
  %v879 = vld [vmem:[#allocation5 + $0x70] sm:$0xff]
  %v880 = vld [vmem:[#allocation5 + $0x78] sm:$0xff]
  %v881 = vsel %vm400, 1, 0
  %v882 = vsel %vm401, 1, 0
  %v883 = vsel %vm402, 1, 0
  %v884 = vsel %vm403, 1, 0
  %v885 = vsel %vm404, 1, 0
  %v886 = vsel %vm405, 1, 0
  %v887 = vsel %vm406, 1, 0
  %v888 = vsel %vm407, 1, 0
  %v889 = vsel %vm408, 1, 0
  %v890 = vsel %vm409, 1, 0
  %v891 = vsel %vm410, 1, 0
  %v892 = vsel %vm411, 1, 0
  %v893 = vsel %vm412, 1, 0
  %v894 = vsel %vm413, 1, 0
  %v895 = vsel %vm414, 1, 0
  %v896 = vsel %vm415, 1, 0
  %v897 = vcvt.s32.f32 %v881
  %v898 = vcvt.s32.f32 %v882
  %v899 = vcvt.s32.f32 %v883
  %v900 = vcvt.s32.f32 %v884
  %v901 = vcvt.s32.f32 %v885
  %v902 = vcvt.s32.f32 %v886
  %v903 = vcvt.s32.f32 %v887
  %v904 = vcvt.s32.f32 %v888
  %v905 = vcvt.s32.f32 %v889
  %v906 = vcvt.s32.f32 %v890
  %v907 = vcvt.s32.f32 %v891
  %v908 = vcvt.s32.f32 %v892
  %v909 = vcvt.s32.f32 %v893
  %v910 = vcvt.s32.f32 %v894
  %v911 = vcvt.s32.f32 %v895
  %v912 = vcvt.s32.f32 %v896
  %913 = vadd.xlane.f32.xlu0 %v897
  %v914 = vpop.xlane.xlu0 %913
  %915 = vadd.xlane.f32.xlu0 %v898
  %v916 = vpop.xlane.xlu0 %915
  %917 = vadd.xlane.f32.xlu0 %v899
  %v918 = vpop.xlane.xlu0 %917
  %919 = vadd.xlane.f32.xlu0 %v900
  %v920 = vpop.xlane.xlu0 %919
  %921 = vadd.xlane.f32.xlu0 %v901
  %v922 = vpop.xlane.xlu0 %921
  %923 = vadd.xlane.f32.xlu0 %v902
  %v924 = vpop.xlane.xlu0 %923
  %925 = vadd.xlane.f32.xlu0 %v903
  %v926 = vpop.xlane.xlu0 %925
  %927 = vadd.xlane.f32.xlu0 %v904
  %v928 = vpop.xlane.xlu0 %927
  %929 = vadd.xlane.f32.xlu0 %v905
  %v930 = vpop.xlane.xlu0 %929
  %931 = vadd.xlane.f32.xlu0 %v906
  %v932 = vpop.xlane.xlu0 %931
  %933 = vadd.xlane.f32.xlu0 %v907
  %v934 = vpop.xlane.xlu0 %933
  %935 = vadd.xlane.f32.xlu0 %v908
  %v936 = vpop.xlane.xlu0 %935
  %937 = vadd.xlane.f32.xlu0 %v909
  %v938 = vpop.xlane.xlu0 %937
  %939 = vadd.xlane.f32.xlu0 %v910
  %v940 = vpop.xlane.xlu0 %939
  %941 = vadd.xlane.f32.xlu0 %v911
  %v942 = vpop.xlane.xlu0 %941
  %943 = vadd.xlane.f32.xlu0 %v912
  %v944 = vpop.xlane.xlu0 %943
  %v945 = vadd.f32 %v865, %v914
  %v946 = vadd.f32 %v866, %v916
  %v947 = vadd.f32 %v867, %v918
  %v948 = vadd.f32 %v868, %v920
  %v949 = vadd.f32 %v869, %v922
  %v950 = vadd.f32 %v870, %v924
  %v951 = vadd.f32 %v871, %v926
  %v952 = vadd.f32 %v872, %v928
  %v953 = vadd.f32 %v873, %v930
  %v954 = vadd.f32 %v874, %v932
  %v955 = vadd.f32 %v875, %v934
  %v956 = vadd.f32 %v876, %v936
  %v957 = vadd.f32 %v877, %v938
  %v958 = vadd.f32 %v878, %v940
  %v959 = vadd.f32 %v879, %v942
  %v960 = vadd.f32 %v880, %v944
  %961 = vst.msk [vmem:[#allocation5] sm:$0xff] %vm736, %v945
  %962 = vst.msk [vmem:[#allocation5 + $0x8] sm:$0xff] %vm736, %v946
  %963 = vst.msk [vmem:[#allocation5 + $0x10] sm:$0xff] %vm736, %v947
  %964 = vst.msk [vmem:[#allocation5 + $0x18] sm:$0xff] %vm736, %v948
  %965 = vst.msk [vmem:[#allocation5 + $0x20] sm:$0xff] %vm736, %v949
  %966 = vst.msk [vmem:[#allocation5 + $0x28] sm:$0xff] %vm736, %v950
  %967 = vst.msk [vmem:[#allocation5 + $0x30] sm:$0xff] %vm736, %v951
  %968 = vst.msk [vmem:[#allocation5 + $0x38] sm:$0xff] %vm736, %v952
  %969 = vst.msk [vmem:[#allocation5 + $0x40] sm:$0xff] %vm736, %v953
  %970 = vst.msk [vmem:[#allocation5 + $0x48] sm:$0xff] %vm736, %v954
  %971 = vst.msk [vmem:[#allocation5 + $0x50] sm:$0xff] %vm736, %v955
  %972 = vst.msk [vmem:[#allocation5 + $0x58] sm:$0xff] %vm736, %v956
  %973 = vst.msk [vmem:[#allocation5 + $0x60] sm:$0xff] %vm736, %v957
  %974 = vst.msk [vmem:[#allocation5 + $0x68] sm:$0xff] %vm736, %v958
  %975 = vst.msk [vmem:[#allocation5 + $0x70] sm:$0xff] %vm736, %v959
  %976 = vst.msk [vmem:[#allocation5 + $0x78] sm:$0xff] %vm736, %v960
  %s977 = smul.u32 0, 128
  %s978 = smul.u32 0, 128
  %s979 = sadd.s32 %s978, 128
  %p980 = scmp.lt.s32.totalorder %s977, %s979
  %s981 = sadd.s32 %s977, 128
  %p982 = scmp.lt.s32.totalorder %s978, %s981
  %p983 = pnand %p980, %p982
  %p984 = pneg %p983
  // Predicated region
  $region22: #{tpu_custom_call.1} parent=0 // pred_check
    _
  $region23: #{tpu_custom_call.1} parent=0 // pred_check_branch
    %986 = sbr.rel (%p983) target = $region25
  $region24: #{tpu_custom_call.1} parent=0 // pred_region
    %s987 = ssub.s32 %s978, %s977
    %v988 = vlaneseq
    %v989 = vshrl.u32 %v988, 7
    %v990 = vadd.s32 %v989, 8
    %v991 = vadd.s32 %v989, 16
    %v992 = vadd.s32 %v989, 24
    %v993 = vadd.s32 %v989, 32
    %v994 = vadd.s32 %v989, 40
    %v995 = vadd.s32 %v989, 48
    %v996 = vadd.s32 %v989, 56
    %v997 = vadd.s32 %v989, 64
    %v998 = vadd.s32 %v989, 72
    %v999 = vadd.s32 %v989, 80
    %v1000 = vadd.s32 %v989, 88
    %v1001 = vadd.s32 %v989, 96
    %v1002 = vadd.s32 %v989, 104
    %v1003 = vadd.s32 %v989, 112
    %v1004 = vadd.s32 %v989, 120
    %v1005 = vlaneseq
    %v1006 = vand.u32 %v1005, 127
    %v1007 = vstv %s987
    %v1008 = vadd.s32 %v1006, %v1007
    %vm1009 = vcmp.eq.s32.totalorder %v989, %v1008
    %vm1010 = vcmp.eq.s32.totalorder %v990, %v1008
    %vm1011 = vcmp.eq.s32.totalorder %v991, %v1008
    %vm1012 = vcmp.eq.s32.totalorder %v992, %v1008
    %vm1013 = vcmp.eq.s32.totalorder %v993, %v1008
    %vm1014 = vcmp.eq.s32.totalorder %v994, %v1008
    %vm1015 = vcmp.eq.s32.totalorder %v995, %v1008
    %vm1016 = vcmp.eq.s32.totalorder %v996, %v1008
    %vm1017 = vcmp.eq.s32.totalorder %v997, %v1008
    %vm1018 = vcmp.eq.s32.totalorder %v998, %v1008
    %vm1019 = vcmp.eq.s32.totalorder %v999, %v1008
    %vm1020 = vcmp.eq.s32.totalorder %v1000, %v1008
    %vm1021 = vcmp.eq.s32.totalorder %v1001, %v1008
    %vm1022 = vcmp.eq.s32.totalorder %v1002, %v1008
    %vm1023 = vcmp.eq.s32.totalorder %v1003, %v1008
    %vm1024 = vcmp.eq.s32.totalorder %v1004, %v1008
    %v1025 = vsel %vm1009, %v315, 0.0
    %v1026 = vsel %vm1010, %v316, 0.0
    %v1027 = vsel %vm1011, %v317, 0.0
    %v1028 = vsel %vm1012, %v318, 0.0
    %v1029 = vsel %vm1013, %v319, 0.0
    %v1030 = vsel %vm1014, %v320, 0.0
    %v1031 = vsel %vm1015, %v321, 0.0
    %v1032 = vsel %vm1016, %v322, 0.0
    %v1033 = vsel %vm1017, %v323, 0.0
    %v1034 = vsel %vm1018, %v324, 0.0
    %v1035 = vsel %vm1019, %v325, 0.0
    %v1036 = vsel %vm1020, %v326, 0.0
    %v1037 = vsel %vm1021, %v327, 0.0
    %v1038 = vsel %vm1022, %v328, 0.0
    %v1039 = vsel %vm1023, %v329, 0.0
    %v1040 = vsel %vm1024, %v330, 0.0
    %1041 = vadd.xlane.f32.xlu0 %v1025
    %v1042 = vpop.xlane.xlu0 %1041
    %1043 = vadd.xlane.f32.xlu0 %v1026
    %v1044 = vpop.xlane.xlu0 %1043
    %1045 = vadd.xlane.f32.xlu0 %v1027
    %v1046 = vpop.xlane.xlu0 %1045
    %1047 = vadd.xlane.f32.xlu0 %v1028
    %v1048 = vpop.xlane.xlu0 %1047
    %1049 = vadd.xlane.f32.xlu0 %v1029
    %v1050 = vpop.xlane.xlu0 %1049
    %1051 = vadd.xlane.f32.xlu0 %v1030
    %v1052 = vpop.xlane.xlu0 %1051
    %1053 = vadd.xlane.f32.xlu0 %v1031
    %v1054 = vpop.xlane.xlu0 %1053
    %1055 = vadd.xlane.f32.xlu0 %v1032
    %v1056 = vpop.xlane.xlu0 %1055
    %1057 = vadd.xlane.f32.xlu0 %v1033
    %v1058 = vpop.xlane.xlu0 %1057
    %1059 = vadd.xlane.f32.xlu0 %v1034
    %v1060 = vpop.xlane.xlu0 %1059
    %1061 = vadd.xlane.f32.xlu0 %v1035
    %v1062 = vpop.xlane.xlu0 %1061
    %1063 = vadd.xlane.f32.xlu0 %v1036
    %v1064 = vpop.xlane.xlu0 %1063
    %1065 = vadd.xlane.f32.xlu0 %v1037
    %v1066 = vpop.xlane.xlu0 %1065
    %1067 = vadd.xlane.f32.xlu0 %v1038
    %v1068 = vpop.xlane.xlu0 %1067
    %1069 = vadd.xlane.f32.xlu0 %v1039
    %v1070 = vpop.xlane.xlu0 %1069
    %1071 = vadd.xlane.f32.xlu0 %v1040
    %v1072 = vpop.xlane.xlu0 %1071
    %vm1073 = vcmp.ge.s32.totalorder %v989, %v1007
    %vm1074 = vcmp.ge.s32.totalorder %v990, %v1007
    %vm1075 = vcmp.ge.s32.totalorder %v991, %v1007
    %vm1076 = vcmp.ge.s32.totalorder %v992, %v1007
    %vm1077 = vcmp.ge.s32.totalorder %v993, %v1007
    %vm1078 = vcmp.ge.s32.totalorder %v994, %v1007
    %vm1079 = vcmp.ge.s32.totalorder %v995, %v1007
    %vm1080 = vcmp.ge.s32.totalorder %v996, %v1007
    %vm1081 = vcmp.ge.s32.totalorder %v997, %v1007
    %vm1082 = vcmp.ge.s32.totalorder %v998, %v1007
    %vm1083 = vcmp.ge.s32.totalorder %v999, %v1007
    %vm1084 = vcmp.ge.s32.totalorder %v1000, %v1007
    %vm1085 = vcmp.ge.s32.totalorder %v1001, %v1007
    %vm1086 = vcmp.ge.s32.totalorder %v1002, %v1007
    %vm1087 = vcmp.ge.s32.totalorder %v1003, %v1007
    %vm1088 = vcmp.ge.s32.totalorder %v1004, %v1007
    %s1089 = sadd.s32 %s987, 128
    %v1090 = vstv %s1089
    %vm1091 = vcmp.lt.s32.totalorder %v989, %v1090
    %vm1092 = vcmp.lt.s32.totalorder %v990, %v1090
    %vm1093 = vcmp.lt.s32.totalorder %v991, %v1090
    %vm1094 = vcmp.lt.s32.totalorder %v992, %v1090
    %vm1095 = vcmp.lt.s32.totalorder %v993, %v1090
    %vm1096 = vcmp.lt.s32.totalorder %v994, %v1090
    %vm1097 = vcmp.lt.s32.totalorder %v995, %v1090
    %vm1098 = vcmp.lt.s32.totalorder %v996, %v1090
    %vm1099 = vcmp.lt.s32.totalorder %v997, %v1090
    %vm1100 = vcmp.lt.s32.totalorder %v998, %v1090
    %vm1101 = vcmp.lt.s32.totalorder %v999, %v1090
    %vm1102 = vcmp.lt.s32.totalorder %v1000, %v1090
    %vm1103 = vcmp.lt.s32.totalorder %v1001, %v1090
    %vm1104 = vcmp.lt.s32.totalorder %v1002, %v1090
    %vm1105 = vcmp.lt.s32.totalorder %v1003, %v1090
    %vm1106 = vcmp.lt.s32.totalorder %v1004, %v1090
    %vm1107 = vmand %vm1073, %vm1091
    %vm1108 = vmand %vm1074, %vm1092
    %vm1109 = vmand %vm1075, %vm1093
    %vm1110 = vmand %vm1076, %vm1094
    %vm1111 = vmand %vm1077, %vm1095
    %vm1112 = vmand %vm1078, %vm1096
    %vm1113 = vmand %vm1079, %vm1097
    %vm1114 = vmand %vm1080, %vm1098
    %vm1115 = vmand %vm1081, %vm1099
    %vm1116 = vmand %vm1082, %vm1100
    %vm1117 = vmand %vm1083, %vm1101
    %vm1118 = vmand %vm1084, %vm1102
    %vm1119 = vmand %vm1085, %vm1103
    %vm1120 = vmand %vm1086, %vm1104
    %vm1121 = vmand %vm1087, %vm1105
    %vm1122 = vmand %vm1088, %vm1106
    %v1123 = vld [vmem:[#allocation3] sm:$0xff]
    %v1124 = vld [vmem:[#allocation3 + $0x8] sm:$0xff]
    %v1125 = vld [vmem:[#allocation3 + $0x10] sm:$0xff]
    %v1126 = vld [vmem:[#allocation3 + $0x18] sm:$0xff]
    %v1127 = vld [vmem:[#allocation3 + $0x20] sm:$0xff]
    %v1128 = vld [vmem:[#allocation3 + $0x28] sm:$0xff]
    %v1129 = vld [vmem:[#allocation3 + $0x30] sm:$0xff]
    %v1130 = vld [vmem:[#allocation3 + $0x38] sm:$0xff]
    %v1131 = vld [vmem:[#allocation3 + $0x40] sm:$0xff]
    %v1132 = vld [vmem:[#allocation3 + $0x48] sm:$0xff]
    %v1133 = vld [vmem:[#allocation3 + $0x50] sm:$0xff]
    %v1134 = vld [vmem:[#allocation3 + $0x58] sm:$0xff]
    %v1135 = vld [vmem:[#allocation3 + $0x60] sm:$0xff]
    %v1136 = vld [vmem:[#allocation3 + $0x68] sm:$0xff]
    %v1137 = vld [vmem:[#allocation3 + $0x70] sm:$0xff]
    %v1138 = vld [vmem:[#allocation3 + $0x78] sm:$0xff]
    %v1139 = vsub.f32 %v1042, %v464
    %v1140 = vsub.f32 %v1044, %v465
    %v1141 = vsub.f32 %v1046, %v466
    %v1142 = vsub.f32 %v1048, %v467
    %v1143 = vsub.f32 %v1050, %v468
    %v1144 = vsub.f32 %v1052, %v469
    %v1145 = vsub.f32 %v1054, %v470
    %v1146 = vsub.f32 %v1056, %v471
    %v1147 = vsub.f32 %v1058, %v472
    %v1148 = vsub.f32 %v1060, %v473
    %v1149 = vsub.f32 %v1062, %v474
    %v1150 = vsub.f32 %v1064, %v475
    %v1151 = vsub.f32 %v1066, %v476
    %v1152 = vsub.f32 %v1068, %v477
    %v1153 = vsub.f32 %v1070, %v478
    %v1154 = vsub.f32 %v1072, %v479
    %v1155 = vmul.f32 %v1139, 1.442695
    %v1156 = vpow.pop %v1155
    %v1157 = vmul.f32 %v1140, 1.442695
    %v1158 = vpow.pop %v1157
    %v1159 = vmul.f32 %v1141, 1.442695
    %v1160 = vpow.pop %v1159
    %v1161 = vmul.f32 %v1142, 1.442695
    %v1162 = vpow.pop %v1161
    %v1163 = vmul.f32 %v1143, 1.442695
    %v1164 = vpow.pop %v1163
    %v1165 = vmul.f32 %v1144, 1.442695
    %v1166 = vpow.pop %v1165
    %v1167 = vmul.f32 %v1145, 1.442695
    %v1168 = vpow.pop %v1167
    %v1169 = vmul.f32 %v1146, 1.442695
    %v1170 = vpow.pop %v1169
    %v1171 = vmul.f32 %v1147, 1.442695
    %v1172 = vpow.pop %v1171
    %v1173 = vmul.f32 %v1148, 1.442695
    %v1174 = vpow.pop %v1173
    %v1175 = vmul.f32 %v1149, 1.442695
    %v1176 = vpow.pop %v1175
    %v1177 = vmul.f32 %v1150, 1.442695
    %v1178 = vpow.pop %v1177
    %v1179 = vmul.f32 %v1151, 1.442695
    %v1180 = vpow.pop %v1179
    %v1181 = vmul.f32 %v1152, 1.442695
    %v1182 = vpow.pop %v1181
    %v1183 = vmul.f32 %v1153, 1.442695
    %v1184 = vpow.pop %v1183
    %v1185 = vmul.f32 %v1154, 1.442695
    %v1186 = vpow.pop %v1185
    %v1187 = vsel %vm1107, %v1156, 0.0
    %v1188 = vsel %vm1108, %v1158, 0.0
    %v1189 = vsel %vm1109, %v1160, 0.0
    %v1190 = vsel %vm1110, %v1162, 0.0
    %v1191 = vsel %vm1111, %v1164, 0.0
    %v1192 = vsel %vm1112, %v1166, 0.0
    %v1193 = vsel %vm1113, %v1168, 0.0
    %v1194 = vsel %vm1114, %v1170, 0.0
    %v1195 = vsel %vm1115, %v1172, 0.0
    %v1196 = vsel %vm1116, %v1174, 0.0
    %v1197 = vsel %vm1117, %v1176, 0.0
    %v1198 = vsel %vm1118, %v1178, 0.0
    %v1199 = vsel %vm1119, %v1180, 0.0
    %v1200 = vsel %vm1120, %v1182, 0.0
    %v1201 = vsel %vm1121, %v1184, 0.0
    %v1202 = vsel %vm1122, %v1186, 0.0
    %v1203 = vsub.f32 %v1123, %v1187
    %v1204 = vsub.f32 %v1124, %v1188
    %v1205 = vsub.f32 %v1125, %v1189
    %v1206 = vsub.f32 %v1126, %v1190
    %v1207 = vsub.f32 %v1127, %v1191
    %v1208 = vsub.f32 %v1128, %v1192
    %v1209 = vsub.f32 %v1129, %v1193
    %v1210 = vsub.f32 %v1130, %v1194
    %v1211 = vsub.f32 %v1131, %v1195
    %v1212 = vsub.f32 %v1132, %v1196
    %v1213 = vsub.f32 %v1133, %v1197
    %v1214 = vsub.f32 %v1134, %v1198
    %v1215 = vsub.f32 %v1135, %v1199
    %v1216 = vsub.f32 %v1136, %v1200
    %v1217 = vsub.f32 %v1137, %v1201
    %v1218 = vsub.f32 %v1138, %v1202
    %1219 = vst.msk [vmem:[#allocation3] sm:$0xff] %vm736, %v1203
    %1220 = vst.msk [vmem:[#allocation3 + $0x8] sm:$0xff] %vm736, %v1204
    %1221 = vst.msk [vmem:[#allocation3 + $0x10] sm:$0xff] %vm736, %v1205
    %1222 = vst.msk [vmem:[#allocation3 + $0x18] sm:$0xff] %vm736, %v1206
    %1223 = vst.msk [vmem:[#allocation3 + $0x20] sm:$0xff] %vm736, %v1207
    %1224 = vst.msk [vmem:[#allocation3 + $0x28] sm:$0xff] %vm736, %v1208
    %1225 = vst.msk [vmem:[#allocation3 + $0x30] sm:$0xff] %vm736, %v1209
    %1226 = vst.msk [vmem:[#allocation3 + $0x38] sm:$0xff] %vm736, %v1210
    %1227 = vst.msk [vmem:[#allocation3 + $0x40] sm:$0xff] %vm736, %v1211
    %1228 = vst.msk [vmem:[#allocation3 + $0x48] sm:$0xff] %vm736, %v1212
    %1229 = vst.msk [vmem:[#allocation3 + $0x50] sm:$0xff] %vm736, %v1213
    %1230 = vst.msk [vmem:[#allocation3 + $0x58] sm:$0xff] %vm736, %v1214
    %1231 = vst.msk [vmem:[#allocation3 + $0x60] sm:$0xff] %vm736, %v1215
    %1232 = vst.msk [vmem:[#allocation3 + $0x68] sm:$0xff] %vm736, %v1216
    %1233 = vst.msk [vmem:[#allocation3 + $0x70] sm:$0xff] %vm736, %v1217
    %1234 = vst.msk [vmem:[#allocation3 + $0x78] sm:$0xff] %vm736, %v1218
    %v1235 = vld [vmem:[#allocation4] sm:$0xff]
    %v1236 = vld [vmem:[#allocation4 + $0x8] sm:$0xff]
    %v1237 = vld [vmem:[#allocation4 + $0x10] sm:$0xff]
    %v1238 = vld [vmem:[#allocation4 + $0x18] sm:$0xff]
    %v1239 = vld [vmem:[#allocation4 + $0x20] sm:$0xff]
    %v1240 = vld [vmem:[#allocation4 + $0x28] sm:$0xff]
    %v1241 = vld [vmem:[#allocation4 + $0x30] sm:$0xff]
    %v1242 = vld [vmem:[#allocation4 + $0x38] sm:$0xff]
    %v1243 = vld [vmem:[#allocation4 + $0x40] sm:$0xff]
    %v1244 = vld [vmem:[#allocation4 + $0x48] sm:$0xff]
    %v1245 = vld [vmem:[#allocation4 + $0x50] sm:$0xff]
    %v1246 = vld [vmem:[#allocation4 + $0x58] sm:$0xff]
    %v1247 = vld [vmem:[#allocation4 + $0x60] sm:$0xff]
    %v1248 = vld [vmem:[#allocation4 + $0x68] sm:$0xff]
    %v1249 = vld [vmem:[#allocation4 + $0x70] sm:$0xff]
    %v1250 = vld [vmem:[#allocation4 + $0x78] sm:$0xff]
    %v1251 = vsel %vm1107, %v1042, 0.0
    %v1252 = vsel %vm1108, %v1044, 0.0
    %v1253 = vsel %vm1109, %v1046, 0.0
    %v1254 = vsel %vm1110, %v1048, 0.0
    %v1255 = vsel %vm1111, %v1050, 0.0
    %v1256 = vsel %vm1112, %v1052, 0.0
    %v1257 = vsel %vm1113, %v1054, 0.0
    %v1258 = vsel %vm1114, %v1056, 0.0
    %v1259 = vsel %vm1115, %v1058, 0.0
    %v1260 = vsel %vm1116, %v1060, 0.0
    %v1261 = vsel %vm1117, %v1062, 0.0
    %v1262 = vsel %vm1118, %v1064, 0.0
    %v1263 = vsel %vm1119, %v1066, 0.0
    %v1264 = vsel %vm1120, %v1068, 0.0
    %v1265 = vsel %vm1121, %v1070, 0.0
    %v1266 = vsel %vm1122, %v1072, 0.0
    %v1267 = vsub.f32 %v1235, %v1251
    %v1268 = vsub.f32 %v1236, %v1252
    %v1269 = vsub.f32 %v1237, %v1253
    %v1270 = vsub.f32 %v1238, %v1254
    %v1271 = vsub.f32 %v1239, %v1255
    %v1272 = vsub.f32 %v1240, %v1256
    %v1273 = vsub.f32 %v1241, %v1257
    %v1274 = vsub.f32 %v1242, %v1258
    %v1275 = vsub.f32 %v1243, %v1259
    %v1276 = vsub.f32 %v1244, %v1260
    %v1277 = vsub.f32 %v1245, %v1261
    %v1278 = vsub.f32 %v1246, %v1262
    %v1279 = vsub.f32 %v1247, %v1263
    %v1280 = vsub.f32 %v1248, %v1264
    %v1281 = vsub.f32 %v1249, %v1265
    %v1282 = vsub.f32 %v1250, %v1266
    %1283 = vst.msk [vmem:[#allocation4] sm:$0xff] %vm736, %v1267
    %1284 = vst.msk [vmem:[#allocation4 + $0x8] sm:$0xff] %vm736, %v1268
    %1285 = vst.msk [vmem:[#allocation4 + $0x10] sm:$0xff] %vm736, %v1269
    %1286 = vst.msk [vmem:[#allocation4 + $0x18] sm:$0xff] %vm736, %v1270
    %1287 = vst.msk [vmem:[#allocation4 + $0x20] sm:$0xff] %vm736, %v1271
    %1288 = vst.msk [vmem:[#allocation4 + $0x28] sm:$0xff] %vm736, %v1272
    %1289 = vst.msk [vmem:[#allocation4 + $0x30] sm:$0xff] %vm736, %v1273
    %1290 = vst.msk [vmem:[#allocation4 + $0x38] sm:$0xff] %vm736, %v1274
    %1291 = vst.msk [vmem:[#allocation4 + $0x40] sm:$0xff] %vm736, %v1275
    %1292 = vst.msk [vmem:[#allocation4 + $0x48] sm:$0xff] %vm736, %v1276
    %1293 = vst.msk [vmem:[#allocation4 + $0x50] sm:$0xff] %vm736, %v1277
    %1294 = vst.msk [vmem:[#allocation4 + $0x58] sm:$0xff] %vm736, %v1278
    %1295 = vst.msk [vmem:[#allocation4 + $0x60] sm:$0xff] %vm736, %v1279
    %1296 = vst.msk [vmem:[#allocation4 + $0x68] sm:$0xff] %vm736, %v1280
    %1297 = vst.msk [vmem:[#allocation4 + $0x70] sm:$0xff] %vm736, %v1281
    %1298 = vst.msk [vmem:[#allocation4 + $0x78] sm:$0xff] %vm736, %v1282
    %v1299 = vld [vmem:[#allocation5] sm:$0xff]
    %v1300 = vld [vmem:[#allocation5 + $0x8] sm:$0xff]
    %v1301 = vld [vmem:[#allocation5 + $0x10] sm:$0xff]
    %v1302 = vld [vmem:[#allocation5 + $0x18] sm:$0xff]
    %v1303 = vld [vmem:[#allocation5 + $0x20] sm:$0xff]
    %v1304 = vld [vmem:[#allocation5 + $0x28] sm:$0xff]
    %v1305 = vld [vmem:[#allocation5 + $0x30] sm:$0xff]
    %v1306 = vld [vmem:[#allocation5 + $0x38] sm:$0xff]
    %v1307 = vld [vmem:[#allocation5 + $0x40] sm:$0xff]
    %v1308 = vld [vmem:[#allocation5 + $0x48] sm:$0xff]
    %v1309 = vld [vmem:[#allocation5 + $0x50] sm:$0xff]
    %v1310 = vld [vmem:[#allocation5 + $0x58] sm:$0xff]
    %v1311 = vld [vmem:[#allocation5 + $0x60] sm:$0xff]
    %v1312 = vld [vmem:[#allocation5 + $0x68] sm:$0xff]
    %v1313 = vld [vmem:[#allocation5 + $0x70] sm:$0xff]
    %v1314 = vld [vmem:[#allocation5 + $0x78] sm:$0xff]
    %v1315 = vsel %vm1107, 1, 0
    %v1316 = vsel %vm1108, 1, 0
    %v1317 = vsel %vm1109, 1, 0
    %v1318 = vsel %vm1110, 1, 0
    %v1319 = vsel %vm1111, 1, 0
    %v1320 = vsel %vm1112, 1, 0
    %v1321 = vsel %vm1113, 1, 0
    %v1322 = vsel %vm1114, 1, 0
    %v1323 = vsel %vm1115, 1, 0
    %v1324 = vsel %vm1116, 1, 0
    %v1325 = vsel %vm1117, 1, 0
    %v1326 = vsel %vm1118, 1, 0
    %v1327 = vsel %vm1119, 1, 0
    %v1328 = vsel %vm1120, 1, 0
    %v1329 = vsel %vm1121, 1, 0
    %v1330 = vsel %vm1122, 1, 0
    %v1331 = vcvt.s32.f32 %v1315
    %v1332 = vcvt.s32.f32 %v1316
    %v1333 = vcvt.s32.f32 %v1317
    %v1334 = vcvt.s32.f32 %v1318
    %v1335 = vcvt.s32.f32 %v1319
    %v1336 = vcvt.s32.f32 %v1320
    %v1337 = vcvt.s32.f32 %v1321
    %v1338 = vcvt.s32.f32 %v1322
    %v1339 = vcvt.s32.f32 %v1323
    %v1340 = vcvt.s32.f32 %v1324
    %v1341 = vcvt.s32.f32 %v1325
    %v1342 = vcvt.s32.f32 %v1326
    %v1343 = vcvt.s32.f32 %v1327
    %v1344 = vcvt.s32.f32 %v1328
    %v1345 = vcvt.s32.f32 %v1329
    %v1346 = vcvt.s32.f32 %v1330
    %v1347 = vsub.f32 %v1299, %v1331
    %v1348 = vsub.f32 %v1300, %v1332
    %v1349 = vsub.f32 %v1301, %v1333
    %v1350 = vsub.f32 %v1302, %v1334
    %v1351 = vsub.f32 %v1303, %v1335
    %v1352 = vsub.f32 %v1304, %v1336
    %v1353 = vsub.f32 %v1305, %v1337
    %v1354 = vsub.f32 %v1306, %v1338
    %v1355 = vsub.f32 %v1307, %v1339
    %v1356 = vsub.f32 %v1308, %v1340
    %v1357 = vsub.f32 %v1309, %v1341
    %v1358 = vsub.f32 %v1310, %v1342
    %v1359 = vsub.f32 %v1311, %v1343
    %v1360 = vsub.f32 %v1312, %v1344
    %v1361 = vsub.f32 %v1313, %v1345
    %v1362 = vsub.f32 %v1314, %v1346
    %1363 = vst.msk [vmem:[#allocation5] sm:$0xff] %vm736, %v1347
    %1364 = vst.msk [vmem:[#allocation5 + $0x8] sm:$0xff] %vm736, %v1348
    %1365 = vst.msk [vmem:[#allocation5 + $0x10] sm:$0xff] %vm736, %v1349
    %1366 = vst.msk [vmem:[#allocation5 + $0x18] sm:$0xff] %vm736, %v1350
    %1367 = vst.msk [vmem:[#allocation5 + $0x20] sm:$0xff] %vm736, %v1351
    %1368 = vst.msk [vmem:[#allocation5 + $0x28] sm:$0xff] %vm736, %v1352
    %1369 = vst.msk [vmem:[#allocation5 + $0x30] sm:$0xff] %vm736, %v1353
    %1370 = vst.msk [vmem:[#allocation5 + $0x38] sm:$0xff] %vm736, %v1354
    %1371 = vst.msk [vmem:[#allocation5 + $0x40] sm:$0xff] %vm736, %v1355
    %1372 = vst.msk [vmem:[#allocation5 + $0x48] sm:$0xff] %vm736, %v1356
    %1373 = vst.msk [vmem:[#allocation5 + $0x50] sm:$0xff] %vm736, %v1357
    %1374 = vst.msk [vmem:[#allocation5 + $0x58] sm:$0xff] %vm736, %v1358
    %1375 = vst.msk [vmem:[#allocation5 + $0x60] sm:$0xff] %vm736, %v1359
    %1376 = vst.msk [vmem:[#allocation5 + $0x68] sm:$0xff] %vm736, %v1360
    %1377 = vst.msk [vmem:[#allocation5 + $0x70] sm:$0xff] %vm736, %v1361
    %1378 = vst.msk [vmem:[#allocation5 + $0x78] sm:$0xff] %vm736, %v1362
  $region25: #{tpu_custom_call.1} parent=0 // pred_fallthru
    _
  // Predicated region
  $region26: #{tpu_custom_call.1} parent=0 // pred_check
    %p1379 = pneg %p18
  $region27: #{tpu_custom_call.1} parent=0 // pred_check_branch
    %1381 = sbr.rel (%p1379) target = $region29
  $region28: #{tpu_custom_call.1} parent=0 // pred_region
    %v1382 = vld [vmem:[#allocation2] sm:$0xff]
    %v1383 = vld [vmem:[#allocation2 + $0x8] sm:$0xff]
    %v1384 = vld [vmem:[#allocation2 + $0x10] sm:$0xff]
    %v1385 = vld [vmem:[#allocation2 + $0x18] sm:$0xff]
    %v1386 = vld [vmem:[#allocation2 + $0x20] sm:$0xff]
    %v1387 = vld [vmem:[#allocation2 + $0x28] sm:$0xff]
    %v1388 = vld [vmem:[#allocation2 + $0x30] sm:$0xff]
    %v1389 = vld [vmem:[#allocation2 + $0x38] sm:$0xff]
    %v1390 = vld [vmem:[#allocation2 + $0x40] sm:$0xff]
    %v1391 = vld [vmem:[#allocation2 + $0x48] sm:$0xff]
    %v1392 = vld [vmem:[#allocation2 + $0x50] sm:$0xff]
    %v1393 = vld [vmem:[#allocation2 + $0x58] sm:$0xff]
    %v1394 = vld [vmem:[#allocation2 + $0x60] sm:$0xff]
    %v1395 = vld [vmem:[#allocation2 + $0x68] sm:$0xff]
    %v1396 = vld [vmem:[#allocation2 + $0x70] sm:$0xff]
    %v1397 = vld [vmem:[#allocation2 + $0x78] sm:$0xff]
    %v1398 = vld [vmem:[#allocation3] sm:$0xff]
    %v1399 = vld [vmem:[#allocation3 + $0x8] sm:$0xff]
    %v1400 = vld [vmem:[#allocation3 + $0x10] sm:$0xff]
    %v1401 = vld [vmem:[#allocation3 + $0x18] sm:$0xff]
    %v1402 = vld [vmem:[#allocation3 + $0x20] sm:$0xff]
    %v1403 = vld [vmem:[#allocation3 + $0x28] sm:$0xff]
    %v1404 = vld [vmem:[#allocation3 + $0x30] sm:$0xff]
    %v1405 = vld [vmem:[#allocation3 + $0x38] sm:$0xff]
    %v1406 = vld [vmem:[#allocation3 + $0x40] sm:$0xff]
    %v1407 = vld [vmem:[#allocation3 + $0x48] sm:$0xff]
    %v1408 = vld [vmem:[#allocation3 + $0x50] sm:$0xff]
    %v1409 = vld [vmem:[#allocation3 + $0x58] sm:$0xff]
    %v1410 = vld [vmem:[#allocation3 + $0x60] sm:$0xff]
    %v1411 = vld [vmem:[#allocation3 + $0x68] sm:$0xff]
    %v1412 = vld [vmem:[#allocation3 + $0x70] sm:$0xff]
    %v1413 = vld [vmem:[#allocation3 + $0x78] sm:$0xff]
    %v1414 = vsub.f32 0.0, %v1382
    %v1415 = vsub.f32 0.0, %v1383
    %v1416 = vsub.f32 0.0, %v1384
    %v1417 = vsub.f32 0.0, %v1385
    %v1418 = vsub.f32 0.0, %v1386
    %v1419 = vsub.f32 0.0, %v1387
    %v1420 = vsub.f32 0.0, %v1388
    %v1421 = vsub.f32 0.0, %v1389
    %v1422 = vsub.f32 0.0, %v1390
    %v1423 = vsub.f32 0.0, %v1391
    %v1424 = vsub.f32 0.0, %v1392
    %v1425 = vsub.f32 0.0, %v1393
    %v1426 = vsub.f32 0.0, %v1394
    %v1427 = vsub.f32 0.0, %v1395
    %v1428 = vsub.f32 0.0, %v1396
    %v1429 = vsub.f32 0.0, %v1397
    %v1430 = vmul.f32 %v1414, 1.442695
    %v1431 = vpow.pop %v1430
    %v1432 = vmul.f32 %v1415, 1.442695
    %v1433 = vpow.pop %v1432
    %v1434 = vmul.f32 %v1416, 1.442695
    %v1435 = vpow.pop %v1434
    %v1436 = vmul.f32 %v1417, 1.442695
    %v1437 = vpow.pop %v1436
    %v1438 = vmul.f32 %v1418, 1.442695
    %v1439 = vpow.pop %v1438
    %v1440 = vmul.f32 %v1419, 1.442695
    %v1441 = vpow.pop %v1440
    %v1442 = vmul.f32 %v1420, 1.442695
    %v1443 = vpow.pop %v1442
    %v1444 = vmul.f32 %v1421, 1.442695
    %v1445 = vpow.pop %v1444
    %v1446 = vmul.f32 %v1422, 1.442695
    %v1447 = vpow.pop %v1446
    %v1448 = vmul.f32 %v1423, 1.442695
    %v1449 = vpow.pop %v1448
    %v1450 = vmul.f32 %v1424, 1.442695
    %v1451 = vpow.pop %v1450
    %v1452 = vmul.f32 %v1425, 1.442695
    %v1453 = vpow.pop %v1452
    %v1454 = vmul.f32 %v1426, 1.442695
    %v1455 = vpow.pop %v1454
    %v1456 = vmul.f32 %v1427, 1.442695
    %v1457 = vpow.pop %v1456
    %v1458 = vmul.f32 %v1428, 1.442695
    %v1459 = vpow.pop %v1458
    %v1460 = vmul.f32 %v1429, 1.442695
    %v1461 = vpow.pop %v1460
    %v1462 = vmul.f32 %v1431, 112.0
    %v1463 = vmul.f32 %v1433, 112.0
    %v1464 = vmul.f32 %v1435, 112.0
    %v1465 = vmul.f32 %v1437, 112.0
    %v1466 = vmul.f32 %v1439, 112.0
    %v1467 = vmul.f32 %v1441, 112.0
    %v1468 = vmul.f32 %v1443, 112.0
    %v1469 = vmul.f32 %v1445, 112.0
    %v1470 = vmul.f32 %v1447, 112.0
    %v1471 = vmul.f32 %v1449, 112.0
    %v1472 = vmul.f32 %v1451, 112.0
    %v1473 = vmul.f32 %v1453, 112.0
    %v1474 = vmul.f32 %v1455, 112.0
    %v1475 = vmul.f32 %v1457, 112.0
    %v1476 = vmul.f32 %v1459, 112.0
    %v1477 = vmul.f32 %v1461, 112.0
    %v1478 = vsub.f32 %v1398, %v1462
    %v1479 = vsub.f32 %v1399, %v1463
    %v1480 = vsub.f32 %v1400, %v1464
    %v1481 = vsub.f32 %v1401, %v1465
    %v1482 = vsub.f32 %v1402, %v1466
    %v1483 = vsub.f32 %v1403, %v1467
    %v1484 = vsub.f32 %v1404, %v1468
    %v1485 = vsub.f32 %v1405, %v1469
    %v1486 = vsub.f32 %v1406, %v1470
    %v1487 = vsub.f32 %v1407, %v1471
    %v1488 = vsub.f32 %v1408, %v1472
    %v1489 = vsub.f32 %v1409, %v1473
    %v1490 = vsub.f32 %v1410, %v1474
    %v1491 = vsub.f32 %v1411, %v1475
    %v1492 = vsub.f32 %v1412, %v1476
    %v1493 = vsub.f32 %v1413, %v1477
    %v1494 = vmax.f32 %v1478, 1e-30
    %v1495 = vmax.f32 %v1479, 1e-30
    %v1496 = vmax.f32 %v1480, 1e-30
    %v1497 = vmax.f32 %v1481, 1e-30
    %v1498 = vmax.f32 %v1482, 1e-30
    %v1499 = vmax.f32 %v1483, 1e-30
    %v1500 = vmax.f32 %v1484, 1e-30
    %v1501 = vmax.f32 %v1485, 1e-30
    %v1502 = vmax.f32 %v1486, 1e-30
    %v1503 = vmax.f32 %v1487, 1e-30
    %v1504 = vmax.f32 %v1488, 1e-30
    %v1505 = vmax.f32 %v1489, 1e-30
    %v1506 = vmax.f32 %v1490, 1e-30
    %v1507 = vmax.f32 %v1491, 1e-30
    %v1508 = vmax.f32 %v1492, 1e-30
    %v1509 = vmax.f32 %v1493, 1e-30
    %v1510 = vlog2.pop %v1494
    %v1511 = vmul.f32 %v1510, 0.6931472
    %v1512 = vlog2.pop %v1495
    %v1513 = vmul.f32 %v1512, 0.6931472
    %v1514 = vlog2.pop %v1496
    %v1515 = vmul.f32 %v1514, 0.6931472
    %v1516 = vlog2.pop %v1497
    %v1517 = vmul.f32 %v1516, 0.6931472
    %v1518 = vlog2.pop %v1498
    %v1519 = vmul.f32 %v1518, 0.6931472
    %v1520 = vlog2.pop %v1499
    %v1521 = vmul.f32 %v1520, 0.6931472
    %v1522 = vlog2.pop %v1500
    %v1523 = vmul.f32 %v1522, 0.6931472
    %v1524 = vlog2.pop %v1501
    %v1525 = vmul.f32 %v1524, 0.6931472
    %v1526 = vlog2.pop %v1502
    %v1527 = vmul.f32 %v1526, 0.6931472
    %v1528 = vlog2.pop %v1503
    %v1529 = vmul.f32 %v1528, 0.6931472
    %v1530 = vlog2.pop %v1504
    %v1531 = vmul.f32 %v1530, 0.6931472
    %v1532 = vlog2.pop %v1505
    %v1533 = vmul.f32 %v1532, 0.6931472
    %v1534 = vlog2.pop %v1506
    %v1535 = vmul.f32 %v1534, 0.6931472
    %v1536 = vlog2.pop %v1507
    %v1537 = vmul.f32 %v1536, 0.6931472
    %v1538 = vlog2.pop %v1508
    %v1539 = vmul.f32 %v1538, 0.6931472
    %v1540 = vlog2.pop %v1509
    %v1541 = vmul.f32 %v1540, 0.6931472
    %v1542 = vadd.f32 %v1382, %v1511
    %v1543 = vadd.f32 %v1383, %v1513
    %v1544 = vadd.f32 %v1384, %v1515
    %v1545 = vadd.f32 %v1385, %v1517
    %v1546 = vadd.f32 %v1386, %v1519
    %v1547 = vadd.f32 %v1387, %v1521
    %v1548 = vadd.f32 %v1388, %v1523
    %v1549 = vadd.f32 %v1389, %v1525
    %v1550 = vadd.f32 %v1390, %v1527
    %v1551 = vadd.f32 %v1391, %v1529
    %v1552 = vadd.f32 %v1392, %v1531
    %v1553 = vadd.f32 %v1393, %v1533
    %v1554 = vadd.f32 %v1394, %v1535
    %v1555 = vadd.f32 %v1395, %v1537
    %v1556 = vadd.f32 %v1396, %v1539
    %v1557 = vadd.f32 %v1397, %v1541
    %v1558 = vld [vmem:[#allocation5] sm:$0xff]
    %v1559 = vld [vmem:[#allocation5 + $0x8] sm:$0xff]
    %v1560 = vld [vmem:[#allocation5 + $0x10] sm:$0xff]
    %v1561 = vld [vmem:[#allocation5 + $0x18] sm:$0xff]
    %v1562 = vld [vmem:[#allocation5 + $0x20] sm:$0xff]
    %v1563 = vld [vmem:[#allocation5 + $0x28] sm:$0xff]
    %v1564 = vld [vmem:[#allocation5 + $0x30] sm:$0xff]
    %v1565 = vld [vmem:[#allocation5 + $0x38] sm:$0xff]
    %v1566 = vld [vmem:[#allocation5 + $0x40] sm:$0xff]
    %v1567 = vld [vmem:[#allocation5 + $0x48] sm:$0xff]
    %v1568 = vld [vmem:[#allocation5 + $0x50] sm:$0xff]
    %v1569 = vld [vmem:[#allocation5 + $0x58] sm:$0xff]
    %v1570 = vld [vmem:[#allocation5 + $0x60] sm:$0xff]
    %v1571 = vld [vmem:[#allocation5 + $0x68] sm:$0xff]
    %v1572 = vld [vmem:[#allocation5 + $0x70] sm:$0xff]
    %v1573 = vld [vmem:[#allocation5 + $0x78] sm:$0xff]
    %v1574 = vld [vmem:[#allocation4] sm:$0xff]
    %v1575 = vld [vmem:[#allocation4 + $0x8] sm:$0xff]
    %v1576 = vld [vmem:[#allocation4 + $0x10] sm:$0xff]
    %v1577 = vld [vmem:[#allocation4 + $0x18] sm:$0xff]
    %v1578 = vld [vmem:[#allocation4 + $0x20] sm:$0xff]
    %v1579 = vld [vmem:[#allocation4 + $0x28] sm:$0xff]
    %v1580 = vld [vmem:[#allocation4 + $0x30] sm:$0xff]
    %v1581 = vld [vmem:[#allocation4 + $0x38] sm:$0xff]
    %v1582 = vld [vmem:[#allocation4 + $0x40] sm:$0xff]
    %v1583 = vld [vmem:[#allocation4 + $0x48] sm:$0xff]
    %v1584 = vld [vmem:[#allocation4 + $0x50] sm:$0xff]
    %v1585 = vld [vmem:[#allocation4 + $0x58] sm:$0xff]
    %v1586 = vld [vmem:[#allocation4 + $0x60] sm:$0xff]
    %v1587 = vld [vmem:[#allocation4 + $0x68] sm:$0xff]
    %v1588 = vld [vmem:[#allocation4 + $0x70] sm:$0xff]
    %v1589 = vld [vmem:[#allocation4 + $0x78] sm:$0xff]
    %v1590 = vmul.f32 %v1542, %v1558
    %v1591 = vmul.f32 %v1543, %v1559
    %v1592 = vmul.f32 %v1544, %v1560
    %v1593 = vmul.f32 %v1545, %v1561
    %v1594 = vmul.f32 %v1546, %v1562
    %v1595 = vmul.f32 %v1547, %v1563
    %v1596 = vmul.f32 %v1548, %v1564
    %v1597 = vmul.f32 %v1549, %v1565
    %v1598 = vmul.f32 %v1550, %v1566
    %v1599 = vmul.f32 %v1551, %v1567
    %v1600 = vmul.f32 %v1552, %v1568
    %v1601 = vmul.f32 %v1553, %v1569
    %v1602 = vmul.f32 %v1554, %v1570
    %v1603 = vmul.f32 %v1555, %v1571
    %v1604 = vmul.f32 %v1556, %v1572
    %v1605 = vmul.f32 %v1557, %v1573
    %v1606 = vsub.f32 %v1574, %v1590
    %v1607 = vsub.f32 %v1575, %v1591
    %v1608 = vsub.f32 %v1576, %v1592
    %v1609 = vsub.f32 %v1577, %v1593
    %v1610 = vsub.f32 %v1578, %v1594
    %v1611 = vsub.f32 %v1579, %v1595
    %v1612 = vsub.f32 %v1580, %v1596
    %v1613 = vsub.f32 %v1581, %v1597
    %v1614 = vsub.f32 %v1582, %v1598
    %v1615 = vsub.f32 %v1583, %v1599
    %v1616 = vsub.f32 %v1584, %v1600
    %v1617 = vsub.f32 %v1585, %v1601
    %v1618 = vsub.f32 %v1586, %v1602
    %v1619 = vsub.f32 %v1587, %v1603
    %v1620 = vsub.f32 %v1588, %v1604
    %v1621 = vsub.f32 %v1589, %v1605
    %v1622 = vadd.f32 %v1558, 1e-07
    %v1623 = vadd.f32 %v1559, 1e-07
    %v1624 = vadd.f32 %v1560, 1e-07
    %v1625 = vadd.f32 %v1561, 1e-07
    %v1626 = vadd.f32 %v1562, 1e-07
    %v1627 = vadd.f32 %v1563, 1e-07
    %v1628 = vadd.f32 %v1564, 1e-07
    %v1629 = vadd.f32 %v1565, 1e-07
    %v1630 = vadd.f32 %v1566, 1e-07
    %v1631 = vadd.f32 %v1567, 1e-07
    %v1632 = vadd.f32 %v1568, 1e-07
    %v1633 = vadd.f32 %v1569, 1e-07
    %v1634 = vadd.f32 %v1570, 1e-07
    %v1635 = vadd.f32 %v1571, 1e-07
    %v1636 = vadd.f32 %v1572, 1e-07
    %v1637 = vadd.f32 %v1573, 1e-07
    %v1638 = vrcp.pop %v1622
    %v1639 = vmul.f32 %v1606, %v1638
    %v1640 = vrcp.pop %v1623
    %v1641 = vmul.f32 %v1607, %v1640
    %v1642 = vrcp.pop %v1624
    %v1643 = vmul.f32 %v1608, %v1642
    %v1644 = vrcp.pop %v1625
    %v1645 = vmul.f32 %v1609, %v1644
    %v1646 = vrcp.pop %v1626
    %v1647 = vmul.f32 %v1610, %v1646
    %v1648 = vrcp.pop %v1627
    %v1649 = vmul.f32 %v1611, %v1648
    %v1650 = vrcp.pop %v1628
    %v1651 = vmul.f32 %v1612, %v1650
    %v1652 = vrcp.pop %v1629
    %v1653 = vmul.f32 %v1613, %v1652
    %v1654 = vrcp.pop %v1630
    %v1655 = vmul.f32 %v1614, %v1654
    %v1656 = vrcp.pop %v1631
    %v1657 = vmul.f32 %v1615, %v1656
    %v1658 = vrcp.pop %v1632
    %v1659 = vmul.f32 %v1616, %v1658
    %v1660 = vrcp.pop %v1633
    %v1661 = vmul.f32 %v1617, %v1660
    %v1662 = vrcp.pop %v1634
    %v1663 = vmul.f32 %v1618, %v1662
    %v1664 = vrcp.pop %v1635
    %v1665 = vmul.f32 %v1619, %v1664
    %v1666 = vrcp.pop %v1636
    %v1667 = vmul.f32 %v1620, %v1666
    %v1668 = vrcp.pop %v1637
    %v1669 = vmul.f32 %v1621, %v1668
    %v1670 = vmul.f32 %v1639, -1.0
    %v1671 = vmul.f32 %v1641, -1.0
    %v1672 = vmul.f32 %v1643, -1.0
    %v1673 = vmul.f32 %v1645, -1.0
    %v1674 = vmul.f32 %v1647, -1.0
    %v1675 = vmul.f32 %v1649, -1.0
    %v1676 = vmul.f32 %v1651, -1.0
    %v1677 = vmul.f32 %v1653, -1.0
    %v1678 = vmul.f32 %v1655, -1.0
    %v1679 = vmul.f32 %v1657, -1.0
    %v1680 = vmul.f32 %v1659, -1.0
    %v1681 = vmul.f32 %v1661, -1.0
    %v1682 = vmul.f32 %v1663, -1.0
    %v1683 = vmul.f32 %v1665, -1.0
    %v1684 = vmul.f32 %v1667, -1.0
    %v1685 = vmul.f32 %v1669, -1.0
    %1686 = vst.msk [vmem:[%s4] sm:$0xff] %vm736, %v1670
    %1687 = vst.msk [vmem:[%s4 + $0x8] sm:$0xff] %vm736, %v1671
    %1688 = vst.msk [vmem:[%s4 + $0x10] sm:$0xff] %vm736, %v1672
    %1689 = vst.msk [vmem:[%s4 + $0x18] sm:$0xff] %vm736, %v1673
    %1690 = vst.msk [vmem:[%s4 + $0x20] sm:$0xff] %vm736, %v1674
    %1691 = vst.msk [vmem:[%s4 + $0x28] sm:$0xff] %vm736, %v1675
    %1692 = vst.msk [vmem:[%s4 + $0x30] sm:$0xff] %vm736, %v1676
    %1693 = vst.msk [vmem:[%s4 + $0x38] sm:$0xff] %vm736, %v1677
    %1694 = vst.msk [vmem:[%s4 + $0x40] sm:$0xff] %vm736, %v1678
    %1695 = vst.msk [vmem:[%s4 + $0x48] sm:$0xff] %vm736, %v1679
    %1696 = vst.msk [vmem:[%s4 + $0x50] sm:$0xff] %vm736, %v1680
    %1697 = vst.msk [vmem:[%s4 + $0x58] sm:$0xff] %vm736, %v1681
    %1698 = vst.msk [vmem:[%s4 + $0x60] sm:$0xff] %vm736, %v1682
    %1699 = vst.msk [vmem:[%s4 + $0x68] sm:$0xff] %vm736, %v1683
    %1700 = vst.msk [vmem:[%s4 + $0x70] sm:$0xff] %vm736, %v1684
    %1701 = vst.msk [vmem:[%s4 + $0x78] sm:$0xff] %vm736, %v1685
  $region29: #{tpu_custom_call.1} parent=0 // pred_fallthru
    _
  // Predicated region
  $region30: #{tpu_custom_call.1} parent=0 // pred_check
    _
  $region31: #{tpu_custom_call.1} parent=0 // pred_check_branch
    %1703 = sbr.rel (0) target = $region33
  $region32: #{tpu_custom_call.1} parent=0 // pred_region
    _
  $region33: #{tpu_custom_call.1} parent=0 // pred_fallthru
    _
  // Predicated region
  $region34: #{tpu_custom_call.1} parent=0 // pred_check
    _
  $region35: #{tpu_custom_call.1} parent=0 // pred_check_branch
    %1705 = sbr.rel (0) target = $region37
  $region36: #{tpu_custom_call.1} parent=0 // pred_region
    _
  $region37: #{tpu_custom_call.1} parent=0 // pred_fallthru
    _

</llo_original>
